<compile_context>
chip_gen: v7x
topology: tpu7x:2x2x1
jax: 0.10.0
libtpu: 0.0.40
codegen_flags: <defaults>
</compile_context>

<pallas_src>
import jax
import jax.numpy as jnp
from jax.experimental import pallas as pl
from jax.experimental.pallas import tpu as pltpu


def _elu(v):
    # ELU with alpha=1.0 (PyTorch default). exp lands on the EUP slot, select on VPU.
    return jnp.where(v > 0, v, jnp.exp(v) - 1.0)


def _decoder_block_kernel(x_ref,
                          w0_ref, b0_ref,
                          wa1_ref, ba1_ref, wb1_ref, bb1_ref,
                          wa2_ref, ba2_ref, wb2_ref, bb2_ref,
                          wa3_ref, ba3_ref, wb3_ref, bb3_ref,
                          o_ref):
    def linear(v, w_ref, b_ref):
        # bf16 MXU matmul with f32 accumulation; the f32 bias is folded into the
        # accumulator right after the dot (each bias is used exactly once, so there
        # is no reusable broadcast to hoist).
        return jnp.dot(v.astype(w_ref.dtype), w_ref[...],
                       preferred_element_type=jnp.float32) + b_ref[...]

    def residual_unit(v, wa, ba, wb, bb):
        # ResidualUnit: x + Linear(ELU(Linear(x)))
        return v + linear(_elu(linear(v, wa, ba)), wb, bb)

    h = _elu(linear(x_ref[...], w0_ref, b0_ref))                    # Linear -> ELU
    h = _elu(residual_unit(h, wa1_ref, ba1_ref, wb1_ref, bb1_ref))  # ResUnit -> ELU
    h = _elu(residual_unit(h, wa2_ref, ba2_ref, wb2_ref, bb2_ref))  # ResUnit -> ELU
    h = residual_unit(h, wa3_ref, ba3_ref, wb3_ref, bb3_ref)        # ResUnit (no ELU)
    o_ref[...] = h.astype(o_ref.dtype)


def _round_up(a, b):
    return (a + b - 1) // b * b


def decoder_block(x, params, *, tm=512, weight_dtype=jnp.bfloat16,
                  vmem_limit_bytes=64 * 1024 * 1024):
    """x: [M, C_in] float32. params: dict of f32 weights/biases (see init_params).

    tm is the row tile: tune per generation (v5e/v6e ~512-2048; v7x ~256-512 given
    its 64 MiB VMEM). It is clamped to the 8-rounded problem size for tiny inputs.
    """
    M, c_in = x.shape
    c_out = params["w0"].shape[1]
    c_pad = _round_up(c_out, 128)          # lane-dense intermediates / output
    pad_c = c_pad - c_out

    # --- pad channels to a multiple of 128 lanes and cast weights to bf16. Zero
    #     padding keeps the valid columns exact: Linear/ELU/residual all map 0 -> 0
    #     in the padded lanes, which are sliced off at the end. ---
    w0 = jnp.pad(params["w0"], ((0, 0), (0, pad_c))).astype(weight_dtype)
    b0 = jnp.pad(params["b0"], ((0, 0), (0, pad_c))).astype(jnp.float32)

    def pad_sq(w):
        return jnp.pad(w, ((0, pad_c), (0, pad_c))).astype(weight_dtype)

    def pad_b(b):
        return jnp.pad(b, ((0, 0), (0, pad_c))).astype(jnp.float32)

    weight_args = [w0, b0]
    for g in ("1", "2", "3"):
        weight_args += [pad_sq(params["wa" + g]), pad_b(params["ba" + g]),
                        pad_sq(params["wb" + g]), pad_b(params["bb" + g])]

    # --- row tiling: big tile, pad M up to a tile multiple (sliced off after). ---
    tm_eff = min(tm, _round_up(max(M, 1), 8))
    m_pad = _round_up(M, tm_eff)
    if m_pad != M:
        x = jnp.pad(x, ((0, m_pad - M), (0, 0)))
    grid = (m_pad // tm_eff,)

    def row_spec(cols):
        return pl.BlockSpec((tm_eff, cols), lambda i: (i, 0))

    def weight_spec(shape, single_buffer):
        if single_buffer:
            # Weights are grid-invariant: one resident buffer is enough; frees VMEM
            # for a larger row tile (matters most on v7x's 64 MiB VMEM).
            return pl.BlockSpec(shape, lambda i: (0, 0),
                                pipeline_mode=pl.Buffered(1))
        return pl.BlockSpec(shape, lambda i: (0, 0))

    # Advisory cost hint so XLA schedules surrounding HBM traffic around this call.
    flops = 2 * m_pad * (c_in * c_pad + 6 * c_pad * c_pad)
    transcendentals = 6 * m_pad * c_pad            # worst-case exp count of the 6 ELUs
    bytes_accessed = (int(x.size) * x.dtype.itemsize
                      + sum(int(w.size) * w.dtype.itemsize for w in weight_args)
                      + m_pad * c_pad * 4)
    cost = pl.CostEstimate(flops=int(flops), transcendentals=int(transcendentals),
                           bytes_accessed=int(bytes_accessed))

    def build(single_buffer_weights):
        weight_specs = [weight_spec(w.shape, single_buffer_weights)
                        for w in weight_args]
        return pl.pallas_call(
            _decoder_block_kernel,
            out_shape=jax.ShapeDtypeStruct((m_pad, c_pad), jnp.float32),
            grid_spec=pltpu.PrefetchScalarGridSpec(
                num_scalar_prefetch=0,
                grid=grid,
                in_specs=[row_spec(c_in)] + weight_specs,
                out_specs=row_spec(c_pad),
            ),
            compiler_params=pltpu.CompilerParams(
                dimension_semantics=("parallel",),   # row axis shards across v7x TCs
                vmem_limit_bytes=vmem_limit_bytes,
            ),
            cost_estimate=cost,
        )

    try:
        out = jax.block_until_ready(build(True)(x, *weight_args))
    except Exception:
        # Fallback for JAX builds that reject single-buffered (Buffered(1)) specs.
        out = build(False)(x, *weight_args)

    return out[:M, :c_out]


def init_params(key, c_in, c_out):
    """Deterministic synthetic parameters. Weights stored as [in, out]
    (i.e. already transposed w.r.t. PyTorch's [out, in]); biases as [1, out]."""
    keys = jax.random.split(key, 14)
    scale_in = 1.0 / jnp.sqrt(c_in)
    scale_out = 1.0 / jnp.sqrt(c_out)
    p = {}
    p["w0"] = jax.random.uniform(keys[0], (c_in, c_out), jnp.float32, -scale_in, scale_in)
    p["b0"] = jax.random.uniform(keys[1], (1, c_out), jnp.float32, -scale_in, scale_in)
    names = ["wa1", "ba1", "wb1", "bb1",
             "wa2", "ba2", "wb2", "bb2",
             "wa3", "ba3", "wb3", "bb3"]
    for idx, name in enumerate(names):
        k = keys[2 + idx]
        if name.startswith("w"):
            p[name] = jax.random.uniform(k, (c_out, c_out), jnp.float32, -scale_out, scale_out)
        else:
            p[name] = jax.random.uniform(k, (1, c_out), jnp.float32, -scale_out, scale_out)
    return p


def decoder_block_ref(x, p, weight_dtype=jnp.bfloat16):
    """Pure-JAX reference of the PyTorch forward, mirroring the kernel's precision
    (bf16 matmul inputs, f32 accumulation, f32 elementwise)."""
    def lin(v, w, b):
        return jnp.dot(v.astype(weight_dtype), w.astype(weight_dtype),
                       preferred_element_type=jnp.float32) + b

    def res(v, wa, ba, wb, bb):
        return v + lin(_elu(lin(v, wa, ba)), wb, bb)

    h = _elu(lin(x, p["w0"], p["b0"]))
    h = _elu(res(h, p["wa1"], p["ba1"], p["wb1"], p["bb1"]))
    h = _elu(res(h, p["wa2"], p["ba2"], p["wb2"], p["bb2"]))
    h = res(h, p["wa3"], p["ba3"], p["wb3"], p["bb3"])
    return h


if __name__ == "__main__":
    key = jax.random.PRNGKey(0)
    k_x, k_p = jax.random.split(key)

    batch, seq = 2, 8
    input_channels, out_channels = 32, 64

    x = jax.random.normal(k_x, (batch, seq, input_channels), jnp.float32)
    params = init_params(k_p, input_channels, out_channels)

    x_flat = x.reshape(batch * seq, input_channels)
    out_flat = decoder_block(x_flat, params, tm=512)
    out = out_flat.reshape(batch, seq, out_channels)
    jax.block_until_ready(out)

    ref = decoder_block_ref(x_flat, params).reshape(batch, seq, out_channels)
    max_err = jnp.max(jnp.abs(out - ref))
    assert jnp.allclose(out, ref, atol=2e-2, rtol=2e-2), \
        f"mismatch vs reference (max abs err {max_err})"

    print("KERNEL_OK")
</pallas_src>

<mosaic_0001>
module attributes {stable_mosaic.version = 11 : i64} {
  func.func @_decoder_block_kernel(%arg0: i32, %arg1: memref<16x32xf32, #tpu.memory_space<vmem>>, %arg2: memref<32x128xbf16, #tpu.memory_space<vmem>>, %arg3: memref<1x128xf32, #tpu.memory_space<vmem>>, %arg4: memref<128x128xbf16, #tpu.memory_space<vmem>>, %arg5: memref<1x128xf32, #tpu.memory_space<vmem>>, %arg6: memref<128x128xbf16, #tpu.memory_space<vmem>>, %arg7: memref<1x128xf32, #tpu.memory_space<vmem>>, %arg8: memref<128x128xbf16, #tpu.memory_space<vmem>>, %arg9: memref<1x128xf32, #tpu.memory_space<vmem>>, %arg10: memref<128x128xbf16, #tpu.memory_space<vmem>>, %arg11: memref<1x128xf32, #tpu.memory_space<vmem>>, %arg12: memref<128x128xbf16, #tpu.memory_space<vmem>>, %arg13: memref<1x128xf32, #tpu.memory_space<vmem>>, %arg14: memref<128x128xbf16, #tpu.memory_space<vmem>>, %arg15: memref<1x128xf32, #tpu.memory_space<vmem>>, %arg16: memref<16x128xf32, #tpu.memory_space<vmem>>) attributes {dimension_semantics = [#tpu.dimension_semantics<parallel>], iteration_bounds = array<i64: 1>, scalar_prefetch = 0 : i64, scratch_operands = 0 : i64, tpu.core_type = #tpu.core_type<tc>, window_params = [{transform_indices = @transform_0, window_bounds = array<i64: 16, 32>}, {pipeline_mode = #tpu.pipeline_mode<synchronous>, transform_indices = @transform_1, window_bounds = array<i64: 32, 128>}, {pipeline_mode = #tpu.pipeline_mode<synchronous>, transform_indices = @transform_2, window_bounds = array<i64: 1, 128>}, {pipeline_mode = #tpu.pipeline_mode<synchronous>, transform_indices = @transform_3, window_bounds = array<i64: 128, 128>}, {pipeline_mode = #tpu.pipeline_mode<synchronous>, transform_indices = @transform_4, window_bounds = array<i64: 1, 128>}, {pipeline_mode = #tpu.pipeline_mode<synchronous>, transform_indices = @transform_5, window_bounds = array<i64: 128, 128>}, {pipeline_mode = #tpu.pipeline_mode<synchronous>, transform_indices = @transform_6, window_bounds = array<i64: 1, 128>}, {pipeline_mode = #tpu.pipeline_mode<synchronous>, transform_indices = @transform_7, window_bounds = array<i64: 128, 128>}, {pipeline_mode = #tpu.pipeline_mode<synchronous>, transform_indices = @transform_8, window_bounds = array<i64: 1, 128>}, {pipeline_mode = #tpu.pipeline_mode<synchronous>, transform_indices = @transform_9, window_bounds = array<i64: 128, 128>}, {pipeline_mode = #tpu.pipeline_mode<synchronous>, transform_indices = @transform_10, window_bounds = array<i64: 1, 128>}, {pipeline_mode = #tpu.pipeline_mode<synchronous>, transform_indices = @transform_11, window_bounds = array<i64: 128, 128>}, {pipeline_mode = #tpu.pipeline_mode<synchronous>, transform_indices = @transform_12, window_bounds = array<i64: 1, 128>}, {pipeline_mode = #tpu.pipeline_mode<synchronous>, transform_indices = @transform_13, window_bounds = array<i64: 128, 128>}, {pipeline_mode = #tpu.pipeline_mode<synchronous>, transform_indices = @transform_14, window_bounds = array<i64: 1, 128>}, {transform_indices = @transform_15, window_bounds = array<i64: 16, 128>}]} {
    %c0 = arith.constant 0 : index
    %c0_0 = arith.constant 0 : index
    %0 = vector.load %arg1[%c0, %c0_0] : memref<16x32xf32, #tpu.memory_space<vmem>>, vector<16x32xf32>
    %1 = arith.truncf %0 : vector<16x32xf32> to vector<16x32xbf16>
    %c0_1 = arith.constant 0 : index
    %c0_2 = arith.constant 0 : index
    %2 = vector.load %arg2[%c0_1, %c0_2] : memref<32x128xbf16, #tpu.memory_space<vmem>>, vector<32x128xbf16>
    %cst = arith.constant dense<0.000000e+00> : vector<16x128xf32>
    %3 = tpu.matmul %1, %2, %cst {dimension_numbers = #tpu.dot_dimension_numbers<[1], [0], [0], [1], [0, 0, 1, 1], [], []>} : vector<16x32xbf16>, vector<32x128xbf16>, vector<16x128xf32> -> vector<16x128xf32>
    %c0_3 = arith.constant 0 : index
    %c0_4 = arith.constant 0 : index
    %4 = vector.load %arg3[%c0_3, %c0_4] : memref<1x128xf32, #tpu.memory_space<vmem>>, vector<1x128xf32>
    %5 = vector.broadcast %4 : vector<1x128xf32> to vector<16x128xf32>
    %6 = arith.addf %3, %5 : vector<16x128xf32>
    %cst_5 = arith.constant 0.000000e+00 : f32
    %7 = vector.broadcast %cst_5 : f32 to vector<16x128xf32>
    %8 = arith.cmpf ogt, %6, %7 : vector<16x128xf32>
    %9 = math.exp %6 : vector<16x128xf32>
    %cst_6 = arith.constant 1.000000e+00 : f32
    %10 = vector.broadcast %cst_6 : f32 to vector<16x128xf32>
    %11 = arith.subf %9, %10 : vector<16x128xf32>
    %12 = arith.select %8, %6, %11 : vector<16x128xi1>, vector<16x128xf32>
    %13 = arith.truncf %12 : vector<16x128xf32> to vector<16x128xbf16>
    %c0_7 = arith.constant 0 : index
    %c0_8 = arith.constant 0 : index
    %14 = vector.load %arg4[%c0_7, %c0_8] : memref<128x128xbf16, #tpu.memory_space<vmem>>, vector<128x128xbf16>
    %cst_9 = arith.constant dense<0.000000e+00> : vector<16x128xf32>
    %15 = tpu.matmul %13, %14, %cst_9 {dimension_numbers = #tpu.dot_dimension_numbers<[1], [0], [0], [1], [0, 0, 1, 1], [], []>} : vector<16x128xbf16>, vector<128x128xbf16>, vector<16x128xf32> -> vector<16x128xf32>
    %c0_10 = arith.constant 0 : index
    %c0_11 = arith.constant 0 : index
    %16 = vector.load %arg5[%c0_10, %c0_11] : memref<1x128xf32, #tpu.memory_space<vmem>>, vector<1x128xf32>
    %17 = vector.broadcast %16 : vector<1x128xf32> to vector<16x128xf32>
    %18 = arith.addf %15, %17 : vector<16x128xf32>
    %cst_12 = arith.constant 0.000000e+00 : f32
    %19 = vector.broadcast %cst_12 : f32 to vector<16x128xf32>
    %20 = arith.cmpf ogt, %18, %19 : vector<16x128xf32>
    %21 = math.exp %18 : vector<16x128xf32>
    %cst_13 = arith.constant 1.000000e+00 : f32
    %22 = vector.broadcast %cst_13 : f32 to vector<16x128xf32>
    %23 = arith.subf %21, %22 : vector<16x128xf32>
    %24 = arith.select %20, %18, %23 : vector<16x128xi1>, vector<16x128xf32>
    %25 = arith.truncf %24 : vector<16x128xf32> to vector<16x128xbf16>
    %c0_14 = arith.constant 0 : index
    %c0_15 = arith.constant 0 : index
    %26 = vector.load %arg6[%c0_14, %c0_15] : memref<128x128xbf16, #tpu.memory_space<vmem>>, vector<128x128xbf16>
    %cst_16 = arith.constant dense<0.000000e+00> : vector<16x128xf32>
    %27 = tpu.matmul %25, %26, %cst_16 {dimension_numbers = #tpu.dot_dimension_numbers<[1], [0], [0], [1], [0, 0, 1, 1], [], []>} : vector<16x128xbf16>, vector<128x128xbf16>, vector<16x128xf32> -> vector<16x128xf32>
    %c0_17 = arith.constant 0 : index
    %c0_18 = arith.constant 0 : index
    %28 = vector.load %arg7[%c0_17, %c0_18] : memref<1x128xf32, #tpu.memory_space<vmem>>, vector<1x128xf32>
    %29 = vector.broadcast %28 : vector<1x128xf32> to vector<16x128xf32>
    %30 = arith.addf %27, %29 : vector<16x128xf32>
    %31 = arith.addf %12, %30 : vector<16x128xf32>
    %cst_19 = arith.constant 0.000000e+00 : f32
    %32 = vector.broadcast %cst_19 : f32 to vector<16x128xf32>
    %33 = arith.cmpf ogt, %31, %32 : vector<16x128xf32>
    %34 = math.exp %31 : vector<16x128xf32>
    %cst_20 = arith.constant 1.000000e+00 : f32
    %35 = vector.broadcast %cst_20 : f32 to vector<16x128xf32>
    %36 = arith.subf %34, %35 : vector<16x128xf32>
    %37 = arith.select %33, %31, %36 : vector<16x128xi1>, vector<16x128xf32>
    %38 = arith.truncf %37 : vector<16x128xf32> to vector<16x128xbf16>
    %c0_21 = arith.constant 0 : index
    %c0_22 = arith.constant 0 : index
    %39 = vector.load %arg8[%c0_21, %c0_22] : memref<128x128xbf16, #tpu.memory_space<vmem>>, vector<128x128xbf16>
    %cst_23 = arith.constant dense<0.000000e+00> : vector<16x128xf32>
    %40 = tpu.matmul %38, %39, %cst_23 {dimension_numbers = #tpu.dot_dimension_numbers<[1], [0], [0], [1], [0, 0, 1, 1], [], []>} : vector<16x128xbf16>, vector<128x128xbf16>, vector<16x128xf32> -> vector<16x128xf32>
    %c0_24 = arith.constant 0 : index
    %c0_25 = arith.constant 0 : index
    %41 = vector.load %arg9[%c0_24, %c0_25] : memref<1x128xf32, #tpu.memory_space<vmem>>, vector<1x128xf32>
    %42 = vector.broadcast %41 : vector<1x128xf32> to vector<16x128xf32>
    %43 = arith.addf %40, %42 : vector<16x128xf32>
    %cst_26 = arith.constant 0.000000e+00 : f32
    %44 = vector.broadcast %cst_26 : f32 to vector<16x128xf32>
    %45 = arith.cmpf ogt, %43, %44 : vector<16x128xf32>
    %46 = math.exp %43 : vector<16x128xf32>
    %cst_27 = arith.constant 1.000000e+00 : f32
    %47 = vector.broadcast %cst_27 : f32 to vector<16x128xf32>
    %48 = arith.subf %46, %47 : vector<16x128xf32>
    %49 = arith.select %45, %43, %48 : vector<16x128xi1>, vector<16x128xf32>
    %50 = arith.truncf %49 : vector<16x128xf32> to vector<16x128xbf16>
    %c0_28 = arith.constant 0 : index
    %c0_29 = arith.constant 0 : index
    %51 = vector.load %arg10[%c0_28, %c0_29] : memref<128x128xbf16, #tpu.memory_space<vmem>>, vector<128x128xbf16>
    %cst_30 = arith.constant dense<0.000000e+00> : vector<16x128xf32>
    %52 = tpu.matmul %50, %51, %cst_30 {dimension_numbers = #tpu.dot_dimension_numbers<[1], [0], [0], [1], [0, 0, 1, 1], [], []>} : vector<16x128xbf16>, vector<128x128xbf16>, vector<16x128xf32> -> vector<16x128xf32>
    %c0_31 = arith.constant 0 : index
    %c0_32 = arith.constant 0 : index
    %53 = vector.load %arg11[%c0_31, %c0_32] : memref<1x128xf32, #tpu.memory_space<vmem>>, vector<1x128xf32>
    %54 = vector.broadcast %53 : vector<1x128xf32> to vector<16x128xf32>
    %55 = arith.addf %52, %54 : vector<16x128xf32>
    %56 = arith.addf %37, %55 : vector<16x128xf32>
    %cst_33 = arith.constant 0.000000e+00 : f32
    %57 = vector.broadcast %cst_33 : f32 to vector<16x128xf32>
    %58 = arith.cmpf ogt, %56, %57 : vector<16x128xf32>
    %59 = math.exp %56 : vector<16x128xf32>
    %cst_34 = arith.constant 1.000000e+00 : f32
    %60 = vector.broadcast %cst_34 : f32 to vector<16x128xf32>
    %61 = arith.subf %59, %60 : vector<16x128xf32>
    %62 = arith.select %58, %56, %61 : vector<16x128xi1>, vector<16x128xf32>
    %63 = arith.truncf %62 : vector<16x128xf32> to vector<16x128xbf16>
    %c0_35 = arith.constant 0 : index
    %c0_36 = arith.constant 0 : index
    %64 = vector.load %arg12[%c0_35, %c0_36] : memref<128x128xbf16, #tpu.memory_space<vmem>>, vector<128x128xbf16>
    %cst_37 = arith.constant dense<0.000000e+00> : vector<16x128xf32>
    %65 = tpu.matmul %63, %64, %cst_37 {dimension_numbers = #tpu.dot_dimension_numbers<[1], [0], [0], [1], [0, 0, 1, 1], [], []>} : vector<16x128xbf16>, vector<128x128xbf16>, vector<16x128xf32> -> vector<16x128xf32>
    %c0_38 = arith.constant 0 : index
    %c0_39 = arith.constant 0 : index
    %66 = vector.load %arg13[%c0_38, %c0_39] : memref<1x128xf32, #tpu.memory_space<vmem>>, vector<1x128xf32>
    %67 = vector.broadcast %66 : vector<1x128xf32> to vector<16x128xf32>
    %68 = arith.addf %65, %67 : vector<16x128xf32>
    %cst_40 = arith.constant 0.000000e+00 : f32
    %69 = vector.broadcast %cst_40 : f32 to vector<16x128xf32>
    %70 = arith.cmpf ogt, %68, %69 : vector<16x128xf32>
    %71 = math.exp %68 : vector<16x128xf32>
    %cst_41 = arith.constant 1.000000e+00 : f32
    %72 = vector.broadcast %cst_41 : f32 to vector<16x128xf32>
    %73 = arith.subf %71, %72 : vector<16x128xf32>
    %74 = arith.select %70, %68, %73 : vector<16x128xi1>, vector<16x128xf32>
    %75 = arith.truncf %74 : vector<16x128xf32> to vector<16x128xbf16>
    %c0_42 = arith.constant 0 : index
    %c0_43 = arith.constant 0 : index
    %76 = vector.load %arg14[%c0_42, %c0_43] : memref<128x128xbf16, #tpu.memory_space<vmem>>, vector<128x128xbf16>
    %cst_44 = arith.constant dense<0.000000e+00> : vector<16x128xf32>
    %77 = tpu.matmul %75, %76, %cst_44 {dimension_numbers = #tpu.dot_dimension_numbers<[1], [0], [0], [1], [0, 0, 1, 1], [], []>} : vector<16x128xbf16>, vector<128x128xbf16>, vector<16x128xf32> -> vector<16x128xf32>
    %c0_45 = arith.constant 0 : index
    %c0_46 = arith.constant 0 : index
    %78 = vector.load %arg15[%c0_45, %c0_46] : memref<1x128xf32, #tpu.memory_space<vmem>>, vector<1x128xf32>
    %79 = vector.broadcast %78 : vector<1x128xf32> to vector<16x128xf32>
    %80 = arith.addf %77, %79 : vector<16x128xf32>
    %81 = arith.addf %62, %80 : vector<16x128xf32>
    %c0_47 = arith.constant 0 : index
    %c0_48 = arith.constant 0 : index
    %82 = vector.load %arg16[%c0_47, %c0_48] : memref<16x128xf32, #tpu.memory_space<vmem>>, vector<16x128xf32>
    tpu.vector_store %arg16[%c0_47, %c0_48], %81 {strides = array<i32>} : memref<16x128xf32, #tpu.memory_space<vmem>>, vector<16x128xf32>,
    return
  }
  func.func @transform_0(%arg0: i32) -> (i32, i32) {
    %c0_i32 = arith.constant 0 : i32
    %c0_i32_0 = arith.constant 0 : i32
    return %arg0, %c0_i32 : i32, i32
  }
  func.func @transform_1(%arg0: i32) -> (i32, i32) {
    %c0_i32 = arith.constant 0 : i32
    %c0_i32_0 = arith.constant 0 : i32
    %c0_i32_1 = arith.constant 0 : i32
    return %c0_i32, %c0_i32_0 : i32, i32
  }
  func.func @transform_2(%arg0: i32) -> (i32, i32) {
    %c0_i32 = arith.constant 0 : i32
    %c0_i32_0 = arith.constant 0 : i32
    %c0_i32_1 = arith.constant 0 : i32
    return %c0_i32, %c0_i32_0 : i32, i32
  }
  func.func @transform_3(%arg0: i32) -> (i32, i32) {
    %c0_i32 = arith.constant 0 : i32
    %c0_i32_0 = arith.constant 0 : i32
    %c0_i32_1 = arith.constant 0 : i32
    return %c0_i32, %c0_i32_0 : i32, i32
  }
  func.func @transform_4(%arg0: i32) -> (i32, i32) {
    %c0_i32 = arith.constant 0 : i32
    %c0_i32_0 = arith.constant 0 : i32
    %c0_i32_1 = arith.constant 0 : i32
    return %c0_i32, %c0_i32_0 : i32, i32
  }
  func.func @transform_5(%arg0: i32) -> (i32, i32) {
    %c0_i32 = arith.constant 0 : i32
    %c0_i32_0 = arith.constant 0 : i32
    %c0_i32_1 = arith.constant 0 : i32
    return %c0_i32, %c0_i32_0 : i32, i32
  }
  func.func @transform_6(%arg0: i32) -> (i32, i32) {
    %c0_i32 = arith.constant 0 : i32
    %c0_i32_0 = arith.constant 0 : i32
    %c0_i32_1 = arith.constant 0 : i32
    return %c0_i32, %c0_i32_0 : i32, i32
  }
  func.func @transform_7(%arg0: i32) -> (i32, i32) {
    %c0_i32 = arith.constant 0 : i32
    %c0_i32_0 = arith.constant 0 : i32
    %c0_i32_1 = arith.constant 0 : i32
    return %c0_i32, %c0_i32_0 : i32, i32
  }
  func.func @transform_8(%arg0: i32) -> (i32, i32) {
    %c0_i32 = arith.constant 0 : i32
    %c0_i32_0 = arith.constant 0 : i32
    %c0_i32_1 = arith.constant 0 : i32
    return %c0_i32, %c0_i32_0 : i32, i32
  }
  func.func @transform_9(%arg0: i32) -> (i32, i32) {
    %c0_i32 = arith.constant 0 : i32
    %c0_i32_0 = arith.constant 0 : i32
    %c0_i32_1 = arith.constant 0 : i32
    return %c0_i32, %c0_i32_0 : i32, i32
  }
  func.func @transform_10(%arg0: i32) -> (i32, i32) {
    %c0_i32 = arith.constant 0 : i32
    %c0_i32_0 = arith.constant 0 : i32
    %c0_i32_1 = arith.constant 0 : i32
    return %c0_i32, %c0_i32_0 : i32, i32
  }
  func.func @transform_11(%arg0: i32) -> (i32, i32) {
    %c0_i32 = arith.constant 0 : i32
    %c0_i32_0 = arith.constant 0 : i32
    %c0_i32_1 = arith.constant 0 : i32
    return %c0_i32, %c0_i32_0 : i32, i32
  }
  func.func @transform_12(%arg0: i32) -> (i32, i32) {
    %c0_i32 = arith.constant 0 : i32
    %c0_i32_0 = arith.constant 0 : i32
    %c0_i32_1 = arith.constant 0 : i32
    return %c0_i32, %c0_i32_0 : i32, i32
  }
  func.func @transform_13(%arg0: i32) -> (i32, i32) {
    %c0_i32 = arith.constant 0 : i32
    %c0_i32_0 = arith.constant 0 : i32
    %c0_i32_1 = arith.constant 0 : i32
    return %c0_i32, %c0_i32_0 : i32, i32
  }
  func.func @transform_14(%arg0: i32) -> (i32, i32) {
    %c0_i32 = arith.constant 0 : i32
    %c0_i32_0 = arith.constant 0 : i32
    %c0_i32_1 = arith.constant 0 : i32
    return %c0_i32, %c0_i32_0 : i32, i32
  }
  func.func @transform_15(%arg0: i32) -> (i32, i32) {
    %c0_i32 = arith.constant 0 : i32
    %c0_i32_0 = arith.constant 0 : i32
    return %arg0, %c0_i32 : i32, i32
  }
}

module attributes {stable_mosaic.version = 11 : i64} {
  func.func @_decoder_block_kernel(%arg0: i32, %arg1: memref<16x32xf32, #tpu.memory_space<vmem>>, %arg2: memref<32x128xbf16, #tpu.memory_space<vmem>>, %arg3: memref<1x128xf32, #tpu.memory_space<vmem>>, %arg4: memref<128x128xbf16, #tpu.memory_space<vmem>>, %arg5: memref<1x128xf32, #tpu.memory_space<vmem>>, %arg6: memref<128x128xbf16, #tpu.memory_space<vmem>>, %arg7: memref<1x128xf32, #tpu.memory_space<vmem>>, %arg8: memref<128x128xbf16, #tpu.memory_space<vmem>>, %arg9: memref<1x128xf32, #tpu.memory_space<vmem>>, %arg10: memref<128x128xbf16, #tpu.memory_space<vmem>>, %arg11: memref<1x128xf32, #tpu.memory_space<vmem>>, %arg12: memref<128x128xbf16, #tpu.memory_space<vmem>>, %arg13: memref<1x128xf32, #tpu.memory_space<vmem>>, %arg14: memref<128x128xbf16, #tpu.memory_space<vmem>>, %arg15: memref<1x128xf32, #tpu.memory_space<vmem>>, %arg16: memref<16x128xf32, #tpu.memory_space<vmem>>) attributes {dimension_semantics = [#tpu.dimension_semantics<parallel>], iteration_bounds = array<i64: 1>, scalar_prefetch = 0 : i64, scratch_operands = 0 : i64, tpu.core_type = #tpu.core_type<tc>, window_params = [{transform_indices = @transform_0, window_bounds = array<i64: 16, 32>}, {pipeline_mode = #tpu.pipeline_mode<synchronous>, transform_indices = @transform_1, window_bounds = array<i64: 32, 128>}, {pipeline_mode = #tpu.pipeline_mode<synchronous>, transform_indices = @transform_2, window_bounds = array<i64: 1, 128>}, {pipeline_mode = #tpu.pipeline_mode<synchronous>, transform_indices = @transform_3, window_bounds = array<i64: 128, 128>}, {pipeline_mode = #tpu.pipeline_mode<synchronous>, transform_indices = @transform_4, window_bounds = array<i64: 1, 128>}, {pipeline_mode = #tpu.pipeline_mode<synchronous>, transform_indices = @transform_5, window_bounds = array<i64: 128, 128>}, {pipeline_mode = #tpu.pipeline_mode<synchronous>, transform_indices = @transform_6, window_bounds = array<i64: 1, 128>}, {pipeline_mode = #tpu.pipeline_mode<synchronous>, transform_indices = @transform_7, window_bounds = array<i64: 128, 128>}, {pipeline_mode = #tpu.pipeline_mode<synchronous>, transform_indices = @transform_8, window_bounds = array<i64: 1, 128>}, {pipeline_mode = #tpu.pipeline_mode<synchronous>, transform_indices = @transform_9, window_bounds = array<i64: 128, 128>}, {pipeline_mode = #tpu.pipeline_mode<synchronous>, transform_indices = @transform_10, window_bounds = array<i64: 1, 128>}, {pipeline_mode = #tpu.pipeline_mode<synchronous>, transform_indices = @transform_11, window_bounds = array<i64: 128, 128>}, {pipeline_mode = #tpu.pipeline_mode<synchronous>, transform_indices = @transform_12, window_bounds = array<i64: 1, 128>}, {pipeline_mode = #tpu.pipeline_mode<synchronous>, transform_indices = @transform_13, window_bounds = array<i64: 128, 128>}, {pipeline_mode = #tpu.pipeline_mode<synchronous>, transform_indices = @transform_14, window_bounds = array<i64: 1, 128>}, {transform_indices = @transform_15, window_bounds = array<i64: 16, 128>}]} {
    %c0 = arith.constant 0 : index
    %c0_0 = arith.constant 0 : index
    %0 = vector.load %arg1[%c0, %c0_0] : memref<16x32xf32, #tpu.memory_space<vmem>>, vector<16x32xf32>
    %1 = arith.truncf %0 : vector<16x32xf32> to vector<16x32xbf16>
    %c0_1 = arith.constant 0 : index
    %c0_2 = arith.constant 0 : index
    %2 = vector.load %arg2[%c0_1, %c0_2] : memref<32x128xbf16, #tpu.memory_space<vmem>>, vector<32x128xbf16>
    %cst = arith.constant dense<0.000000e+00> : vector<16x128xf32>
    %3 = tpu.matmul %1, %2, %cst {dimension_numbers = #tpu.dot_dimension_numbers<[1], [0], [0], [1], [0, 0, 1, 1], [], []>} : vector<16x32xbf16>, vector<32x128xbf16>, vector<16x128xf32> -> vector<16x128xf32>
    %c0_3 = arith.constant 0 : index
    %c0_4 = arith.constant 0 : index
    %4 = vector.load %arg3[%c0_3, %c0_4] : memref<1x128xf32, #tpu.memory_space<vmem>>, vector<1x128xf32>
    %5 = vector.broadcast %4 : vector<1x128xf32> to vector<16x128xf32>
    %6 = arith.addf %3, %5 : vector<16x128xf32>
    %cst_5 = arith.constant 0.000000e+00 : f32
    %7 = vector.broadcast %cst_5 : f32 to vector<16x128xf32>
    %8 = arith.cmpf ogt, %6, %7 : vector<16x128xf32>
    %9 = math.exp %6 : vector<16x128xf32>
    %cst_6 = arith.constant 1.000000e+00 : f32
    %10 = vector.broadcast %cst_6 : f32 to vector<16x128xf32>
    %11 = arith.subf %9, %10 : vector<16x128xf32>
    %12 = arith.select %8, %6, %11 : vector<16x128xi1>, vector<16x128xf32>
    %13 = arith.truncf %12 : vector<16x128xf32> to vector<16x128xbf16>
    %c0_7 = arith.constant 0 : index
    %c0_8 = arith.constant 0 : index
    %14 = vector.load %arg4[%c0_7, %c0_8] : memref<128x128xbf16, #tpu.memory_space<vmem>>, vector<128x128xbf16>
    %cst_9 = arith.constant dense<0.000000e+00> : vector<16x128xf32>
    %15 = tpu.matmul %13, %14, %cst_9 {dimension_numbers = #tpu.dot_dimension_numbers<[1], [0], [0], [1], [0, 0, 1, 1], [], []>} : vector<16x128xbf16>, vector<128x128xbf16>, vector<16x128xf32> -> vector<16x128xf32>
    %c0_10 = arith.constant 0 : index
    %c0_11 = arith.constant 0 : index
    %16 = vector.load %arg5[%c0_10, %c0_11] : memref<1x128xf32, #tpu.memory_space<vmem>>, vector<1x128xf32>
    %17 = vector.broadcast %16 : vector<1x128xf32> to vector<16x128xf32>
    %18 = arith.addf %15, %17 : vector<16x128xf32>
    %cst_12 = arith.constant 0.000000e+00 : f32
    %19 = vector.broadcast %cst_12 : f32 to vector<16x128xf32>
    %20 = arith.cmpf ogt, %18, %19 : vector<16x128xf32>
    %21 = math.exp %18 : vector<16x128xf32>
    %cst_13 = arith.constant 1.000000e+00 : f32
    %22 = vector.broadcast %cst_13 : f32 to vector<16x128xf32>
    %23 = arith.subf %21, %22 : vector<16x128xf32>
    %24 = arith.select %20, %18, %23 : vector<16x128xi1>, vector<16x128xf32>
    %25 = arith.truncf %24 : vector<16x128xf32> to vector<16x128xbf16>
    %c0_14 = arith.constant 0 : index
    %c0_15 = arith.constant 0 : index
    %26 = vector.load %arg6[%c0_14, %c0_15] : memref<128x128xbf16, #tpu.memory_space<vmem>>, vector<128x128xbf16>
    %cst_16 = arith.constant dense<0.000000e+00> : vector<16x128xf32>
    %27 = tpu.matmul %25, %26, %cst_16 {dimension_numbers = #tpu.dot_dimension_numbers<[1], [0], [0], [1], [0, 0, 1, 1], [], []>} : vector<16x128xbf16>, vector<128x128xbf16>, vector<16x128xf32> -> vector<16x128xf32>
    %c0_17 = arith.constant 0 : index
    %c0_18 = arith.constant 0 : index
    %28 = vector.load %arg7[%c0_17, %c0_18] : memref<1x128xf32, #tpu.memory_space<vmem>>, vector<1x128xf32>
    %29 = vector.broadcast %28 : vector<1x128xf32> to vector<16x128xf32>
    %30 = arith.addf %27, %29 : vector<16x128xf32>
    %31 = arith.addf %12, %30 : vector<16x128xf32>
    %cst_19 = arith.constant 0.000000e+00 : f32
    %32 = vector.broadcast %cst_19 : f32 to vector<16x128xf32>
    %33 = arith.cmpf ogt, %31, %32 : vector<16x128xf32>
    %34 = math.exp %31 : vector<16x128xf32>
    %cst_20 = arith.constant 1.000000e+00 : f32
    %35 = vector.broadcast %cst_20 : f32 to vector<16x128xf32>
    %36 = arith.subf %34, %35 : vector<16x128xf32>
    %37 = arith.select %33, %31, %36 : vector<16x128xi1>, vector<16x128xf32>
    %38 = arith.truncf %37 : vector<16x128xf32> to vector<16x128xbf16>
    %c0_21 = arith.constant 0 : index
    %c0_22 = arith.constant 0 : index
    %39 = vector.load %arg8[%c0_21, %c0_22] : memref<128x128xbf16, #tpu.memory_space<vmem>>, vector<128x128xbf16>
    %cst_23 = arith.constant dense<0.000000e+00> : vector<16x128xf32>
    %40 = tpu.matmul %38, %39, %cst_23 {dimension_numbers = #tpu.dot_dimension_numbers<[1], [0], [0], [1], [0, 0, 1, 1], [], []>} : vector<16x128xbf16>, vector<128x128xbf16>, vector<16x128xf32> -> vector<16x128xf32>
    %c0_24 = arith.constant 0 : index
    %c0_25 = arith.constant 0 : index
    %41 = vector.load %arg9[%c0_24, %c0_25] : memref<1x128xf32, #tpu.memory_space<vmem>>, vector<1x128xf32>
    %42 = vector.broadcast %41 : vector<1x128xf32> to vector<16x128xf32>
    %43 = arith.addf %40, %42 : vector<16x128xf32>
    %cst_26 = arith.constant 0.000000e+00 : f32
    %44 = vector.broadcast %cst_26 : f32 to vector<16x128xf32>
    %45 = arith.cmpf ogt, %43, %44 : vector<16x128xf32>
    %46 = math.exp %43 : vector<16x128xf32>
    %cst_27 = arith.constant 1.000000e+00 : f32
    %47 = vector.broadcast %cst_27 : f32 to vector<16x128xf32>
    %48 = arith.subf %46, %47 : vector<16x128xf32>
    %49 = arith.select %45, %43, %48 : vector<16x128xi1>, vector<16x128xf32>
    %50 = arith.truncf %49 : vector<16x128xf32> to vector<16x128xbf16>
    %c0_28 = arith.constant 0 : index
    %c0_29 = arith.constant 0 : index
    %51 = vector.load %arg10[%c0_28, %c0_29] : memref<128x128xbf16, #tpu.memory_space<vmem>>, vector<128x128xbf16>
    %cst_30 = arith.constant dense<0.000000e+00> : vector<16x128xf32>
    %52 = tpu.matmul %50, %51, %cst_30 {dimension_numbers = #tpu.dot_dimension_numbers<[1], [0], [0], [1], [0, 0, 1, 1], [], []>} : vector<16x128xbf16>, vector<128x128xbf16>, vector<16x128xf32> -> vector<16x128xf32>
    %c0_31 = arith.constant 0 : index
    %c0_32 = arith.constant 0 : index
    %53 = vector.load %arg11[%c0_31, %c0_32] : memref<1x128xf32, #tpu.memory_space<vmem>>, vector<1x128xf32>
    %54 = vector.broadcast %53 : vector<1x128xf32> to vector<16x128xf32>
    %55 = arith.addf %52, %54 : vector<16x128xf32>
    %56 = arith.addf %37, %55 : vector<16x128xf32>
    %cst_33 = arith.constant 0.000000e+00 : f32
    %57 = vector.broadcast %cst_33 : f32 to vector<16x128xf32>
    %58 = arith.cmpf ogt, %56, %57 : vector<16x128xf32>
    %59 = math.exp %56 : vector<16x128xf32>
    %cst_34 = arith.constant 1.000000e+00 : f32
    %60 = vector.broadcast %cst_34 : f32 to vector<16x128xf32>
    %61 = arith.subf %59, %60 : vector<16x128xf32>
    %62 = arith.select %58, %56, %61 : vector<16x128xi1>, vector<16x128xf32>
    %63 = arith.truncf %62 : vector<16x128xf32> to vector<16x128xbf16>
    %c0_35 = arith.constant 0 : index
    %c0_36 = arith.constant 0 : index
    %64 = vector.load %arg12[%c0_35, %c0_36] : memref<128x128xbf16, #tpu.memory_space<vmem>>, vector<128x128xbf16>
    %cst_37 = arith.constant dense<0.000000e+00> : vector<16x128xf32>
    %65 = tpu.matmul %63, %64, %cst_37 {dimension_numbers = #tpu.dot_dimension_numbers<[1], [0], [0], [1], [0, 0, 1, 1], [], []>} : vector<16x128xbf16>, vector<128x128xbf16>, vector<16x128xf32> -> vector<16x128xf32>
    %c0_38 = arith.constant 0 : index
    %c0_39 = arith.constant 0 : index
    %66 = vector.load %arg13[%c0_38, %c0_39] : memref<1x128xf32, #tpu.memory_space<vmem>>, vector<1x128xf32>
    %67 = vector.broadcast %66 : vector<1x128xf32> to vector<16x128xf32>
    %68 = arith.addf %65, %67 : vector<16x128xf32>
    %cst_40 = arith.constant 0.000000e+00 : f32
    %69 = vector.broadcast %cst_40 : f32 to vector<16x128xf32>
    %70 = arith.cmpf ogt, %68, %69 : vector<16x128xf32>
    %71 = math.exp %68 : vector<16x128xf32>
    %cst_41 = arith.constant 1.000000e+00 : f32
    %72 = vector.broadcast %cst_41 : f32 to vector<16x128xf32>
    %73 = arith.subf %71, %72 : vector<16x128xf32>
    %74 = arith.select %70, %68, %73 : vector<16x128xi1>, vector<16x128xf32>
    %75 = arith.truncf %74 : vector<16x128xf32> to vector<16x128xbf16>
    %c0_42 = arith.constant 0 : index
    %c0_43 = arith.constant 0 : index
    %76 = vector.load %arg14[%c0_42, %c0_43] : memref<128x128xbf16, #tpu.memory_space<vmem>>, vector<128x128xbf16>
    %cst_44 = arith.constant dense<0.000000e+00> : vector<16x128xf32>
    %77 = tpu.matmul %75, %76, %cst_44 {dimension_numbers = #tpu.dot_dimension_numbers<[1], [0], [0], [1], [0, 0, 1, 1], [], []>} : vector<16x128xbf16>, vector<128x128xbf16>, vector<16x128xf32> -> vector<16x128xf32>
    %c0_45 = arith.constant 0 : index
    %c0_46 = arith.constant 0 : index
    %78 = vector.load %arg15[%c0_45, %c0_46] : memref<1x128xf32, #tpu.memory_space<vmem>>, vector<1x128xf32>
    %79 = vector.broadcast %78 : vector<1x128xf32> to vector<16x128xf32>
    %80 = arith.addf %77, %79 : vector<16x128xf32>
    %81 = arith.addf %62, %80 : vector<16x128xf32>
    %c0_47 = arith.constant 0 : index
    %c0_48 = arith.constant 0 : index
    %82 = vector.load %arg16[%c0_47, %c0_48] : memref<16x128xf32, #tpu.memory_space<vmem>>, vector<16x128xf32>
    tpu.vector_store %arg16[%c0_47, %c0_48], %81 {strides = array<i32>} : memref<16x128xf32, #tpu.memory_space<vmem>>, vector<16x128xf32>,
    return
  }
  func.func @transform_0(%arg0: i32) -> (i32, i32) {
    %c0_i32 = arith.constant 0 : i32
    %c0_i32_0 = arith.constant 0 : i32
    return %arg0, %c0_i32 : i32, i32
  }
  func.func @transform_1(%arg0: i32) -> (i32, i32) {
    %c0_i32 = arith.constant 0 : i32
    %c0_i32_0 = arith.constant 0 : i32
    %c0_i32_1 = arith.constant 0 : i32
    return %c0_i32, %c0_i32_0 : i32, i32
  }
  func.func @transform_2(%arg0: i32) -> (i32, i32) {
    %c0_i32 = arith.constant 0 : i32
    %c0_i32_0 = arith.constant 0 : i32
    %c0_i32_1 = arith.constant 0 : i32
    return %c0_i32, %c0_i32_0 : i32, i32
  }
  func.func @transform_3(%arg0: i32) -> (i32, i32) {
    %c0_i32 = arith.constant 0 : i32
    %c0_i32_0 = arith.constant 0 : i32
    %c0_i32_1 = arith.constant 0 : i32
    return %c0_i32, %c0_i32_0 : i32, i32
  }
  func.func @transform_4(%arg0: i32) -> (i32, i32) {
    %c0_i32 = arith.constant 0 : i32
    %c0_i32_0 = arith.constant 0 : i32
    %c0_i32_1 = arith.constant 0 : i32
    return %c0_i32, %c0_i32_0 : i32, i32
  }
  func.func @transform_5(%arg0: i32) -> (i32, i32) {
    %c0_i32 = arith.constant 0 : i32
    %c0_i32_0 = arith.constant 0 : i32
    %c0_i32_1 = arith.constant 0 : i32
    return %c0_i32, %c0_i32_0 : i32, i32
  }
  func.func @transform_6(%arg0: i32) -> (i32, i32) {
    %c0_i32 = arith.constant 0 : i32
    %c0_i32_0 = arith.constant 0 : i32
    %c0_i32_1 = arith.constant 0 : i32
    return %c0_i32, %c0_i32_0 : i32, i32
  }
  func.func @transform_7(%arg0: i32) -> (i32, i32) {
    %c0_i32 = arith.constant 0 : i32
    %c0_i32_0 = arith.constant 0 : i32
    %c0_i32_1 = arith.constant 0 : i32
    return %c0_i32, %c0_i32_0 : i32, i32
  }
  func.func @transform_8(%arg0: i32) -> (i32, i32) {
    %c0_i32 = arith.constant 0 : i32
    %c0_i32_0 = arith.constant 0 : i32
    %c0_i32_1 = arith.constant 0 : i32
    return %c0_i32, %c0_i32_0 : i32, i32
  }
  func.func @transform_9(%arg0: i32) -> (i32, i32) {
    %c0_i32 = arith.constant 0 : i32
    %c0_i32_0 = arith.constant 0 : i32
    %c0_i32_1 = arith.constant 0 : i32
    return %c0_i32, %c0_i32_0 : i32, i32
  }
  func.func @transform_10(%arg0: i32) -> (i32, i32) {
    %c0_i32 = arith.constant 0 : i32
    %c0_i32_0 = arith.constant 0 : i32
    %c0_i32_1 = arith.constant 0 : i32
    return %c0_i32, %c0_i32_0 : i32, i32
  }
  func.func @transform_11(%arg0: i32) -> (i32, i32) {
    %c0_i32 = arith.constant 0 : i32
    %c0_i32_0 = arith.constant 0 : i32
    %c0_i32_1 = arith.constant 0 : i32
    return %c0_i32, %c0_i32_0 : i32, i32
  }
  func.func @transform_12(%arg0: i32) -> (i32, i32) {
    %c0_i32 = arith.constant 0 : i32
    %c0_i32_0 = arith.constant 0 : i32
    %c0_i32_1 = arith.constant 0 : i32
    return %c0_i32, %c0_i32_0 : i32, i32
  }
  func.func @transform_13(%arg0: i32) -> (i32, i32) {
    %c0_i32 = arith.constant 0 : i32
    %c0_i32_0 = arith.constant 0 : i32
    %c0_i32_1 = arith.constant 0 : i32
    return %c0_i32, %c0_i32_0 : i32, i32
  }
  func.func @transform_14(%arg0: i32) -> (i32, i32) {
    %c0_i32 = arith.constant 0 : i32
    %c0_i32_0 = arith.constant 0 : i32
    %c0_i32_1 = arith.constant 0 : i32
    return %c0_i32, %c0_i32_0 : i32, i32
  }
  func.func @transform_15(%arg0: i32) -> (i32, i32) {
    %c0_i32 = arith.constant 0 : i32
    %c0_i32_0 = arith.constant 0 : i32
    return %arg0, %c0_i32 : i32, i32
  }
}

</mosaic_0001>

<llo_original>
// kernel: tpu_custom_call.1
$region0: #{tpu_custom_call.1}
  #allocation0 [shape = 'u32[]', space=smem, size = 0x4, offset = 0x4, fixed_abs, tag = 'smem constant byte address 0x4 - core index']
  #allocation1 [shape = 'u32[144,128]{1,0:T(1,128)}', space=vmem, size = 0x12000, scoped, tag = 'internal scratch']
  %s0 = inlined_call_operand.hbm [shape: f32[16,32], index: 0, kind: input, shape index: {}]
  %s1 = inlined_call_operand.hbm [shape: bf16[32,128], index: 1, kind: input, shape index: {}]
  %s2 = inlined_call_operand.hbm [shape: f32[1,128], index: 2, kind: input, shape index: {}]
  %s3 = inlined_call_operand.hbm [shape: bf16[128,128], index: 3, kind: input, shape index: {}]
  %s4 = inlined_call_operand.hbm [shape: f32[1,128], index: 4, kind: input, shape index: {}]
  %s5 = inlined_call_operand.hbm [shape: bf16[128,128], index: 5, kind: input, shape index: {}]
  %s6 = inlined_call_operand.hbm [shape: f32[1,128], index: 6, kind: input, shape index: {}]
  %s7 = inlined_call_operand.hbm [shape: bf16[128,128], index: 7, kind: input, shape index: {}]
  %s8 = inlined_call_operand.hbm [shape: f32[1,128], index: 8, kind: input, shape index: {}]
  %s9 = inlined_call_operand.hbm [shape: bf16[128,128], index: 9, kind: input, shape index: {}]
  %s10 = inlined_call_operand.hbm [shape: f32[1,128], index: 10, kind: input, shape index: {}]
  %s11 = inlined_call_operand.hbm [shape: bf16[128,128], index: 11, kind: input, shape index: {}]
  %s12 = inlined_call_operand.hbm [shape: f32[1,128], index: 12, kind: input, shape index: {}]
  %s13 = inlined_call_operand.hbm [shape: bf16[128,128], index: 13, kind: input, shape index: {}]
  %s14 = inlined_call_operand.hbm [shape: f32[1,128], index: 14, kind: input, shape index: {}]
  %s15 = inlined_call_operand.hbm [shape: f32[16,128], index: 15, kind: output, shape index: {}]
  %s16 = sld [smem:[#allocation0]]
  $region130: #{tpu_custom_call.1} parent=0
    _
  %s18 = ssub.s32 1, %s16
  %s19 = scalar_select 0, %s18, %s16
  $region1: #{tpu_custom_call.1} parent=0
    #allocation2 [shape = 'u8[8192]{0}', space=vmem, size = 0x2000, scoped, tag = 'input window, operand 0, single buffered']
    #allocation3 [shape = 's32[1]{0}', space=sflag, size = 0x4, scoped, tag = 'scoped memory for tpu_custom_call.1']
    #allocation4 [shape = 's32[1]{0}', space=sflag, size = 0x4, scoped, tag = 'scoped memory for tpu_custom_call.1']
    #allocation5 [shape = 'u8[8192]{0}', space=vmem, size = 0x2000, scoped, tag = 'input window, operand 1, single buffered']
    #allocation6 [shape = 's32[1]{0}', space=sflag, size = 0x4, scoped, tag = 'scoped memory for tpu_custom_call.1']
    #allocation7 [shape = 'u8[512]{0}', space=vmem, size = 0x400, scoped, tag = 'input window, operand 2, single buffered']
    #allocation8 [shape = 'u8[32768]{0}', space=vmem, size = 0x8000, scoped, tag = 'input window, operand 3, single buffered']
    #allocation9 [shape = 's32[1]{0}', space=sflag, size = 0x4, scoped, tag = 'scoped memory for tpu_custom_call.1']
    #allocation10 [shape = 'u8[512]{0}', space=vmem, size = 0x400, scoped, tag = 'input window, operand 4, single buffered']
    #allocation11 [shape = 'u8[32768]{0}', space=vmem, size = 0x8000, scoped, tag = 'input window, operand 5, single buffered']
    #allocation12 [shape = 's32[1]{0}', space=sflag, size = 0x4, scoped, tag = 'scoped memory for tpu_custom_call.1']
    #allocation13 [shape = 'u8[512]{0}', space=vmem, size = 0x400, scoped, tag = 'input window, operand 6, single buffered']
    #allocation14 [shape = 'u8[32768]{0}', space=vmem, size = 0x8000, scoped, tag = 'input window, operand 7, single buffered']
    #allocation15 [shape = 's32[1]{0}', space=sflag, size = 0x4, scoped, tag = 'scoped memory for tpu_custom_call.1']
    #allocation16 [shape = 'u8[512]{0}', space=vmem, size = 0x400, scoped, tag = 'input window, operand 8, single buffered']
    #allocation17 [shape = 'u8[32768]{0}', space=vmem, size = 0x8000, scoped, tag = 'input window, operand 9, single buffered']
    #allocation18 [shape = 's32[1]{0}', space=sflag, size = 0x4, scoped, tag = 'scoped memory for tpu_custom_call.1']
    #allocation19 [shape = 'u8[512]{0}', space=vmem, size = 0x400, scoped, tag = 'input window, operand 10, single buffered']
    #allocation20 [shape = 'u8[32768]{0}', space=vmem, size = 0x8000, scoped, tag = 'input window, operand 11, single buffered']
    #allocation21 [shape = 's32[1]{0}', space=sflag, size = 0x4, scoped, tag = 'scoped memory for tpu_custom_call.1']
    #allocation22 [shape = 'u8[512]{0}', space=vmem, size = 0x400, scoped, tag = 'input window, operand 12, single buffered']
    #allocation23 [shape = 'u8[32768]{0}', space=vmem, size = 0x8000, scoped, tag = 'input window, operand 13, single buffered']
    #allocation24 [shape = 's32[1]{0}', space=sflag, size = 0x4, scoped, tag = 'scoped memory for tpu_custom_call.1']
    #allocation25 [shape = 'u8[512]{0}', space=vmem, size = 0x400, scoped, tag = 'input window, operand 14, single buffered']
    #allocation26 [shape = 'u8[8192]{0}', space=vmem, size = 0x2000, scoped, tag = 'output window, operand 0, single buffered']
    %20 = vsyncpa [#allocation3], 0
    %21 = vsyncpa [#allocation6], 0
    %22 = vsyncpa [#allocation9], 0
    %23 = vsyncpa [#allocation12], 0
    %24 = vsyncpa [#allocation15], 0
    %25 = vsyncpa [#allocation18], 0
    %26 = vsyncpa [#allocation21], 0
    %27 = vsyncpa [#allocation24], 0
    %28 = vsyncpa [#allocation4], 0
    // Predicated region
    $region2: #{tpu_custom_call.1} parent=1 // pred_check
      _
    $region3: #{tpu_custom_call.1} parent=1 // pred_check_branch
      %30 = sbr.rel (0) target = $region5
    $region4: #{tpu_custom_call.1} parent=1 // pred_region
      %s32 = ssub.s32 256, 256
      %33 = vsyncadd [#allocation3], %s32
      %s34 = sshll.u32 [#allocation2], 4
      %s35 = int_to_ptr.vmem [resolvable:$true] %s34
      %40 = dma.hbm_to_vmem [thread:$0]  %s0, 256, %s35, [#allocation3], 128, 128, 8
    $region5: #{tpu_custom_call.1} parent=1 // pred_fallthru
      _
    // Predicated region
    $region6: #{tpu_custom_call.1} parent=1 // pred_check
      _
    $region7: #{tpu_custom_call.1} parent=1 // pred_check_branch
      %42 = sbr.rel (0) target = $region9
    $region8: #{tpu_custom_call.1} parent=1 // pred_region
      %s44 = ssub.s32 256, 256
      %45 = vsyncadd [#allocation6], %s44
      %s46 = sshll.u32 [#allocation5], 4
      %s47 = int_to_ptr.vmem [resolvable:$true] %s46
      %52 = dma.hbm_to_vmem [thread:$0]  %s1, 256, %s47, [#allocation6], 64, 64, 4
    $region9: #{tpu_custom_call.1} parent=1 // pred_fallthru
      _
    // Predicated region
    $region10: #{tpu_custom_call.1} parent=1 // pred_check
      _
    $region11: #{tpu_custom_call.1} parent=1 // pred_check_branch
      %54 = sbr.rel (0) target = $region13
    $region12: #{tpu_custom_call.1} parent=1 // pred_region
      %s56 = ssub.s32 16, 16
      %57 = vsyncadd [#allocation6], %s56
      %s59 = sshll.u32 [#allocation7], 4
      %s60 = int_to_ptr.vmem [resolvable:$true] %s59
      %62 = dma.hbm_to_vmem [thread:$0]  %s2, 16, %s60, [#allocation6]
    $region13: #{tpu_custom_call.1} parent=1 // pred_fallthru
      _
    // Predicated region
    $region14: #{tpu_custom_call.1} parent=1 // pred_check
      _
    $region15: #{tpu_custom_call.1} parent=1 // pred_check_branch
      %64 = sbr.rel (0) target = $region17
    $region16: #{tpu_custom_call.1} parent=1 // pred_region
      %s66 = ssub.s32 1024, 1024
      %67 = vsyncadd [#allocation9], %s66
      %s68 = sshll.u32 [#allocation8], 4
      %s69 = int_to_ptr.vmem [resolvable:$true] %s68
      %74 = dma.hbm_to_vmem [thread:$0]  %s3, 1024, %s69, [#allocation9], 64, 64, 4
    $region17: #{tpu_custom_call.1} parent=1 // pred_fallthru
      _
    // Predicated region
    $region18: #{tpu_custom_call.1} parent=1 // pred_check
      _
    $region19: #{tpu_custom_call.1} parent=1 // pred_check_branch
      %76 = sbr.rel (0) target = $region21
    $region20: #{tpu_custom_call.1} parent=1 // pred_region
      %s78 = ssub.s32 16, 16
      %79 = vsyncadd [#allocation9], %s78
      %s81 = sshll.u32 [#allocation10], 4
      %s82 = int_to_ptr.vmem [resolvable:$true] %s81
      %84 = dma.hbm_to_vmem [thread:$0]  %s4, 16, %s82, [#allocation9]
    $region21: #{tpu_custom_call.1} parent=1 // pred_fallthru
      _
    // Predicated region
    $region22: #{tpu_custom_call.1} parent=1 // pred_check
      _
    $region23: #{tpu_custom_call.1} parent=1 // pred_check_branch
      %86 = sbr.rel (0) target = $region25
    $region24: #{tpu_custom_call.1} parent=1 // pred_region
      %s88 = ssub.s32 1024, 1024
      %89 = vsyncadd [#allocation12], %s88
      %s90 = sshll.u32 [#allocation11], 4
      %s91 = int_to_ptr.vmem [resolvable:$true] %s90
      %96 = dma.hbm_to_vmem [thread:$0]  %s5, 1024, %s91, [#allocation12], 64, 64, 4
    $region25: #{tpu_custom_call.1} parent=1 // pred_fallthru
      _
    // Predicated region
    $region26: #{tpu_custom_call.1} parent=1 // pred_check
      _
    $region27: #{tpu_custom_call.1} parent=1 // pred_check_branch
      %98 = sbr.rel (0) target = $region29
    $region28: #{tpu_custom_call.1} parent=1 // pred_region
      %s100 = ssub.s32 16, 16
      %101 = vsyncadd [#allocation12], %s100
      %s103 = sshll.u32 [#allocation13], 4
      %s104 = int_to_ptr.vmem [resolvable:$true] %s103
      %106 = dma.hbm_to_vmem [thread:$0]  %s6, 16, %s104, [#allocation12]
    $region29: #{tpu_custom_call.1} parent=1 // pred_fallthru
      _
    // Predicated region
    $region30: #{tpu_custom_call.1} parent=1 // pred_check
      _
    $region31: #{tpu_custom_call.1} parent=1 // pred_check_branch
      %108 = sbr.rel (0) target = $region33
    $region32: #{tpu_custom_call.1} parent=1 // pred_region
      %s110 = ssub.s32 1024, 1024
      %111 = vsyncadd [#allocation15], %s110
      %s112 = sshll.u32 [#allocation14], 4
      %s113 = int_to_ptr.vmem [resolvable:$true] %s112
      %118 = dma.hbm_to_vmem [thread:$0]  %s7, 1024, %s113, [#allocation15], 64, 64, 4
    $region33: #{tpu_custom_call.1} parent=1 // pred_fallthru
      _
    // Predicated region
    $region34: #{tpu_custom_call.1} parent=1 // pred_check
      _
    $region35: #{tpu_custom_call.1} parent=1 // pred_check_branch
      %120 = sbr.rel (0) target = $region37
    $region36: #{tpu_custom_call.1} parent=1 // pred_region
      %s122 = ssub.s32 16, 16
      %123 = vsyncadd [#allocation15], %s122
      %s125 = sshll.u32 [#allocation16], 4
      %s126 = int_to_ptr.vmem [resolvable:$true] %s125
      %128 = dma.hbm_to_vmem [thread:$0]  %s8, 16, %s126, [#allocation15]
    $region37: #{tpu_custom_call.1} parent=1 // pred_fallthru
      _
    // Predicated region
    $region38: #{tpu_custom_call.1} parent=1 // pred_check
      _
    $region39: #{tpu_custom_call.1} parent=1 // pred_check_branch
      %130 = sbr.rel (0) target = $region41
    $region40: #{tpu_custom_call.1} parent=1 // pred_region
      %s132 = ssub.s32 1024, 1024
      %133 = vsyncadd [#allocation18], %s132
      %s134 = sshll.u32 [#allocation17], 4
      %s135 = int_to_ptr.vmem [resolvable:$true] %s134
      %140 = dma.hbm_to_vmem [thread:$0]  %s9, 1024, %s135, [#allocation18], 64, 64, 4
    $region41: #{tpu_custom_call.1} parent=1 // pred_fallthru
      _
    // Predicated region
    $region42: #{tpu_custom_call.1} parent=1 // pred_check
      _
    $region43: #{tpu_custom_call.1} parent=1 // pred_check_branch
      %142 = sbr.rel (0) target = $region45
    $region44: #{tpu_custom_call.1} parent=1 // pred_region
      %s144 = ssub.s32 16, 16
      %145 = vsyncadd [#allocation18], %s144
      %s147 = sshll.u32 [#allocation19], 4
      %s148 = int_to_ptr.vmem [resolvable:$true] %s147
      %150 = dma.hbm_to_vmem [thread:$0]  %s10, 16, %s148, [#allocation18]
    $region45: #{tpu_custom_call.1} parent=1 // pred_fallthru
      _
    // Predicated region
    $region46: #{tpu_custom_call.1} parent=1 // pred_check
      _
    $region47: #{tpu_custom_call.1} parent=1 // pred_check_branch
      %152 = sbr.rel (0) target = $region49
    $region48: #{tpu_custom_call.1} parent=1 // pred_region
      %s154 = ssub.s32 1024, 1024
      %155 = vsyncadd [#allocation21], %s154
      %s156 = sshll.u32 [#allocation20], 4
      %s157 = int_to_ptr.vmem [resolvable:$true] %s156
      %162 = dma.hbm_to_vmem [thread:$0]  %s11, 1024, %s157, [#allocation21], 64, 64, 4
    $region49: #{tpu_custom_call.1} parent=1 // pred_fallthru
      _
    // Predicated region
    $region50: #{tpu_custom_call.1} parent=1 // pred_check
      _
    $region51: #{tpu_custom_call.1} parent=1 // pred_check_branch
      %164 = sbr.rel (0) target = $region53
    $region52: #{tpu_custom_call.1} parent=1 // pred_region
      %s166 = ssub.s32 16, 16
      %167 = vsyncadd [#allocation21], %s166
      %s169 = sshll.u32 [#allocation22], 4
      %s170 = int_to_ptr.vmem [resolvable:$true] %s169
      %172 = dma.hbm_to_vmem [thread:$0]  %s12, 16, %s170, [#allocation21]
    $region53: #{tpu_custom_call.1} parent=1 // pred_fallthru
      _
    // Predicated region
    $region54: #{tpu_custom_call.1} parent=1 // pred_check
      _
    $region55: #{tpu_custom_call.1} parent=1 // pred_check_branch
      %174 = sbr.rel (0) target = $region57
    $region56: #{tpu_custom_call.1} parent=1 // pred_region
      %s176 = ssub.s32 1024, 1024
      %177 = vsyncadd [#allocation24], %s176
      %s178 = sshll.u32 [#allocation23], 4
      %s179 = int_to_ptr.vmem [resolvable:$true] %s178
      %184 = dma.hbm_to_vmem [thread:$0]  %s13, 1024, %s179, [#allocation24], 64, 64, 4
    $region57: #{tpu_custom_call.1} parent=1 // pred_fallthru
      _
    // Predicated region
    $region58: #{tpu_custom_call.1} parent=1 // pred_check
      _
    $region59: #{tpu_custom_call.1} parent=1 // pred_check_branch
      %186 = sbr.rel (0) target = $region61
    $region60: #{tpu_custom_call.1} parent=1 // pred_region
      %s188 = ssub.s32 16, 16
      %189 = vsyncadd [#allocation24], %s188
      %s191 = sshll.u32 [#allocation25], 4
      %s192 = int_to_ptr.vmem [resolvable:$true] %s191
      %194 = dma.hbm_to_vmem [thread:$0]  %s14, 16, %s192, [#allocation24]
    $region61: #{tpu_custom_call.1} parent=1 // pred_fallthru
      _
    // Predicated region
    $region62: #{tpu_custom_call.1} parent=1 // pred_check
      _
    $region63: #{tpu_custom_call.1} parent=1 // pred_check_branch
      %196 = sbr.rel (0) target = $region65
    $region64: #{tpu_custom_call.1} parent=1 // pred_region
      %197 = dma.done [#allocation3], 256
    $region65: #{tpu_custom_call.1} parent=1 // pred_fallthru
      _
    // Predicated region
    $region66: #{tpu_custom_call.1} parent=1 // pred_check
      _
    $region67: #{tpu_custom_call.1} parent=1 // pred_check_branch
      %199 = sbr.rel (0) target = $region69
    $region68: #{tpu_custom_call.1} parent=1 // pred_region
      %200 = dma.done [#allocation6], 256
    $region69: #{tpu_custom_call.1} parent=1 // pred_fallthru
      _
    // Predicated region
    $region70: #{tpu_custom_call.1} parent=1 // pred_check
      _
    $region71: #{tpu_custom_call.1} parent=1 // pred_check_branch
      %202 = sbr.rel (0) target = $region73
    $region72: #{tpu_custom_call.1} parent=1 // pred_region
      %203 = dma.done [#allocation6], 16
    $region73: #{tpu_custom_call.1} parent=1 // pred_fallthru
      _
    // Predicated region
    $region74: #{tpu_custom_call.1} parent=1 // pred_check
      _
    $region75: #{tpu_custom_call.1} parent=1 // pred_check_branch
      %205 = sbr.rel (0) target = $region77
    $region76: #{tpu_custom_call.1} parent=1 // pred_region
      %206 = dma.done [#allocation9], 1024
    $region77: #{tpu_custom_call.1} parent=1 // pred_fallthru
      _
    // Predicated region
    $region78: #{tpu_custom_call.1} parent=1 // pred_check
      _
    $region79: #{tpu_custom_call.1} parent=1 // pred_check_branch
      %208 = sbr.rel (0) target = $region81
    $region80: #{tpu_custom_call.1} parent=1 // pred_region
      %209 = dma.done [#allocation9], 16
    $region81: #{tpu_custom_call.1} parent=1 // pred_fallthru
      _
    // Predicated region
    $region82: #{tpu_custom_call.1} parent=1 // pred_check
      _
    $region83: #{tpu_custom_call.1} parent=1 // pred_check_branch
      %211 = sbr.rel (0) target = $region85
    $region84: #{tpu_custom_call.1} parent=1 // pred_region
      %212 = dma.done [#allocation12], 1024
    $region85: #{tpu_custom_call.1} parent=1 // pred_fallthru
      _
    // Predicated region
    $region86: #{tpu_custom_call.1} parent=1 // pred_check
      _
    $region87: #{tpu_custom_call.1} parent=1 // pred_check_branch
      %214 = sbr.rel (0) target = $region89
    $region88: #{tpu_custom_call.1} parent=1 // pred_region
      %215 = dma.done [#allocation12], 16
    $region89: #{tpu_custom_call.1} parent=1 // pred_fallthru
      _
    // Predicated region
    $region90: #{tpu_custom_call.1} parent=1 // pred_check
      _
    $region91: #{tpu_custom_call.1} parent=1 // pred_check_branch
      %217 = sbr.rel (0) target = $region93
    $region92: #{tpu_custom_call.1} parent=1 // pred_region
      %218 = dma.done [#allocation15], 1024
    $region93: #{tpu_custom_call.1} parent=1 // pred_fallthru
      _
    // Predicated region
    $region94: #{tpu_custom_call.1} parent=1 // pred_check
      _
    $region95: #{tpu_custom_call.1} parent=1 // pred_check_branch
      %220 = sbr.rel (0) target = $region97
    $region96: #{tpu_custom_call.1} parent=1 // pred_region
      %221 = dma.done [#allocation15], 16
    $region97: #{tpu_custom_call.1} parent=1 // pred_fallthru
      _
    // Predicated region
    $region98: #{tpu_custom_call.1} parent=1 // pred_check
      _
    $region99: #{tpu_custom_call.1} parent=1 // pred_check_branch
      %223 = sbr.rel (0) target = $region101
    $region100: #{tpu_custom_call.1} parent=1 // pred_region
      %224 = dma.done [#allocation18], 1024
    $region101: #{tpu_custom_call.1} parent=1 // pred_fallthru
      _
    // Predicated region
    $region102: #{tpu_custom_call.1} parent=1 // pred_check
      _
    $region103: #{tpu_custom_call.1} parent=1 // pred_check_branch
      %226 = sbr.rel (0) target = $region105
    $region104: #{tpu_custom_call.1} parent=1 // pred_region
      %227 = dma.done [#allocation18], 16
    $region105: #{tpu_custom_call.1} parent=1 // pred_fallthru
      _
    // Predicated region
    $region106: #{tpu_custom_call.1} parent=1 // pred_check
      _
    $region107: #{tpu_custom_call.1} parent=1 // pred_check_branch
      %229 = sbr.rel (0) target = $region109
    $region108: #{tpu_custom_call.1} parent=1 // pred_region
      %230 = dma.done [#allocation21], 1024
    $region109: #{tpu_custom_call.1} parent=1 // pred_fallthru
      _
    // Predicated region
    $region110: #{tpu_custom_call.1} parent=1 // pred_check
      _
    $region111: #{tpu_custom_call.1} parent=1 // pred_check_branch
      %232 = sbr.rel (0) target = $region113
    $region112: #{tpu_custom_call.1} parent=1 // pred_region
      %233 = dma.done [#allocation21], 16
    $region113: #{tpu_custom_call.1} parent=1 // pred_fallthru
      _
    // Predicated region
    $region114: #{tpu_custom_call.1} parent=1 // pred_check
      _
    $region115: #{tpu_custom_call.1} parent=1 // pred_check_branch
      %235 = sbr.rel (0) target = $region117
    $region116: #{tpu_custom_call.1} parent=1 // pred_region
      %236 = dma.done [#allocation24], 1024
    $region117: #{tpu_custom_call.1} parent=1 // pred_fallthru
      _
    // Predicated region
    $region118: #{tpu_custom_call.1} parent=1 // pred_check
      _
    $region119: #{tpu_custom_call.1} parent=1 // pred_check_branch
      %238 = sbr.rel (0) target = $region121
    $region120: #{tpu_custom_call.1} parent=1 // pred_region
      %239 = dma.done [#allocation24], 16
    $region121: #{tpu_custom_call.1} parent=1 // pred_fallthru
      _
    %v241 = vld [vmem:[#allocation2] sm:$0xff]
    %v242 = vld [vmem:[#allocation2 + $0x8] sm:$0xff]
    %v243 = vpack.c.bf16 %v242, %v241
    %v244 = vld [vmem:[#allocation5] sm:$0xf]
    %v245 = vld [vmem:[#allocation5 + $0x4] sm:$0xf]
    %v246 = vld [vmem:[#allocation5 + $0x8] sm:$0xf]
    %v247 = vld [vmem:[#allocation5 + $0xc] sm:$0xf]
    %v248 = vld [vmem:[#allocation7] sm:$0x1]
    %v250 = vlaneseq
    %v251 = vshrl.u32 %v250, 7
    %v252 = vsub.s32 0, %v251
    %v253 = vrot.slane %v248, %v252
    %v259 = vunpack.c.l.b16 %v244
    %v260 = vunpack.c.l.b16 %v245
    %v261 = vunpack.c.l.b16 %v246
    %v262 = vunpack.c.l.b16 %v247
    %v263 = vpack.c.b16 %v260, %v259
    %v264 = vpack.c.b16 %v262, %v261
    %vm267 = vcmask 261120
    %v269 = vsel %vm267, %v243, 0
    %271 = vmatprep.subr.bf16.mxu0 0
    %272 = vmatpush1.bf16.msra.mxu0 %v263
    %273 = vmatprep.subr.bf16.mxu0 0
    %274 = vmatpush1.bf16.msra.mxu0 %v264
    %275 = vmatprep.subr.bf16.mxu0 0
    %276 = vmatpush1.bf16.msra.mxu0 0
    %277 = vmatprep.subr.bf16.mxu0 0
    %278 = vmatpush1.bf16.msra.mxu0 0
    %279 = vmatprep.subr.bf16.mxu0 0
    %280 = vmatpush1.bf16.msra.mxu0 0
    %281 = vmatprep.subr.bf16.mxu0 0
    %282 = vmatpush1.bf16.msra.mxu0 0
    %283 = vmatprep.subr.bf16.mxu0 0
    %284 = vmatpush1.bf16.msra.mxu0 0
    %285 = vmatprep.subr.bf16.mxu0 0
    %286 = vmatpush1.bf16.msra.mxu0 0
    %287 = vmatprep.subr.bf16.mxu0 0
    %288 = vmatpush1.bf16.msra.mxu0 0
    %289 = vmatprep.subr.bf16.mxu0 0
    %290 = vmatpush1.bf16.msra.mxu0 0
    %291 = vmatprep.subr.bf16.mxu0 0
    %292 = vmatpush1.bf16.msra.mxu0 0
    %293 = vmatprep.subr.bf16.mxu0 0
    %294 = vmatpush1.bf16.msra.mxu0 0
    %295 = vmatprep.subr.bf16.mxu0 0
    %296 = vmatpush1.bf16.msra.mxu0 0
    %297 = vmatprep.subr.bf16.mxu0 0
    %298 = vmatpush1.bf16.msra.mxu0 0
    %299 = vmatprep.subr.bf16.mxu0 0
    %300 = vmatpush1.bf16.msra.mxu0 0
    %301 = vmatprep.subr.bf16.mxu0 0
    %302 = vmatpush1.bf16.msra.mxu0 0
    %303 = vmatprep.mubr.bf16.mxu0 0
    %304 = vmatmul.mubr.bf16.gmra.mrb[0].mxu0 %v269
    %v305 = vpop.f32.mrb[0].mxu0
    %v306 = vadd.f32 %v253, %v305
    %v307 = vpop.f32.mrb[0].mxu0
    %v308 = vpop.f32.mrb[0].mxu0
    %v309 = vadd.f32 %v253, %v308
    %v310 = vpop.f32.mrb[0].mxu0
    %311 = vdwg.mxu0
    %vm312 = vcmp.gt.f32.partialorder %v306, 0.0
    %vm313 = vcmp.gt.f32.partialorder %v309, 0.0
    %v314 = vmul.f32 %v306, 1.442695
    %v315 = vpow.pop %v314
    %v316 = vmul.f32 %v309, 1.442695
    %v317 = vpow.pop %v316
    %v318 = vsub.f32 %v315, 1.0
    %v319 = vsub.f32 %v317, 1.0
    %v320 = vsel %vm312, %v306, %v318
    %v321 = vsel %vm313, %v309, %v319
    %v322 = vpack.c.bf16 %v321, %v320
    %v323 = vld [vmem:[#allocation8] sm:$0xf]
    %v324 = vld [vmem:[#allocation8 + $0x4] sm:$0xf]
    %v325 = vld [vmem:[#allocation8 + $0x8] sm:$0xf]
    %v326 = vld [vmem:[#allocation8 + $0xc] sm:$0xf]
    %v327 = vld [vmem:[#allocation8 + $0x10] sm:$0xf]
    %v328 = vld [vmem:[#allocation8 + $0x14] sm:$0xf]
    %v329 = vld [vmem:[#allocation8 + $0x18] sm:$0xf]
    %v330 = vld [vmem:[#allocation8 + $0x1c] sm:$0xf]
    %v331 = vld [vmem:[#allocation8 + $0x20] sm:$0xf]
    %v332 = vld [vmem:[#allocation8 + $0x24] sm:$0xf]
    %v333 = vld [vmem:[#allocation8 + $0x28] sm:$0xf]
    %v334 = vld [vmem:[#allocation8 + $0x2c] sm:$0xf]
    %v335 = vld [vmem:[#allocation8 + $0x30] sm:$0xf]
    %v336 = vld [vmem:[#allocation8 + $0x34] sm:$0xf]
    %v337 = vld [vmem:[#allocation8 + $0x38] sm:$0xf]
    %v338 = vld [vmem:[#allocation8 + $0x3c] sm:$0xf]
    %v339 = vld [vmem:[#allocation10] sm:$0x1]
    %v341 = vlaneseq
    %v342 = vshrl.u32 %v341, 7
    %v343 = vsub.s32 0, %v342
    %v344 = vrot.slane %v339, %v343
    %v362 = vunpack.c.l.b16 %v323
    %v363 = vunpack.c.l.b16 %v324
    %v364 = vunpack.c.l.b16 %v325
    %v365 = vunpack.c.l.b16 %v326
    %v366 = vunpack.c.l.b16 %v327
    %v367 = vunpack.c.l.b16 %v328
    %v368 = vunpack.c.l.b16 %v329
    %v369 = vunpack.c.l.b16 %v330
    %v370 = vunpack.c.l.b16 %v331
    %v371 = vunpack.c.l.b16 %v332
    %v372 = vunpack.c.l.b16 %v333
    %v373 = vunpack.c.l.b16 %v334
    %v374 = vunpack.c.l.b16 %v335
    %v375 = vunpack.c.l.b16 %v336
    %v376 = vunpack.c.l.b16 %v337
    %v377 = vunpack.c.l.b16 %v338
    %v378 = vpack.c.b16 %v363, %v362
    %v379 = vpack.c.b16 %v365, %v364
    %v380 = vpack.c.b16 %v367, %v366
    %v381 = vpack.c.b16 %v369, %v368
    %v382 = vpack.c.b16 %v371, %v370
    %v383 = vpack.c.b16 %v373, %v372
    %v384 = vpack.c.b16 %v375, %v374
    %v385 = vpack.c.b16 %v377, %v376
    %394 = vmatprep.subr.bf16.mxu0 0
    %395 = vmatpush1.bf16.msra.mxu0 %v378
    %396 = vmatprep.subr.bf16.mxu0 0
    %397 = vmatpush1.bf16.msra.mxu0 %v379
    %398 = vmatprep.subr.bf16.mxu0 0
    %399 = vmatpush1.bf16.msra.mxu0 %v380
    %400 = vmatprep.subr.bf16.mxu0 0
    %401 = vmatpush1.bf16.msra.mxu0 %v381
    %402 = vmatprep.subr.bf16.mxu0 0
    %403 = vmatpush1.bf16.msra.mxu0 %v382
    %404 = vmatprep.subr.bf16.mxu0 0
    %405 = vmatpush1.bf16.msra.mxu0 %v383
    %406 = vmatprep.subr.bf16.mxu0 0
    %407 = vmatpush1.bf16.msra.mxu0 %v384
    %408 = vmatprep.subr.bf16.mxu0 0
    %409 = vmatpush1.bf16.msra.mxu0 %v385
    %410 = vmatprep.subr.bf16.mxu0 0
    %411 = vmatpush1.bf16.msra.mxu0 0
    %412 = vmatprep.subr.bf16.mxu0 0
    %413 = vmatpush1.bf16.msra.mxu0 0
    %414 = vmatprep.subr.bf16.mxu0 0
    %415 = vmatpush1.bf16.msra.mxu0 0
    %416 = vmatprep.subr.bf16.mxu0 0
    %417 = vmatpush1.bf16.msra.mxu0 0
    %418 = vmatprep.subr.bf16.mxu0 0
    %419 = vmatpush1.bf16.msra.mxu0 0
    %420 = vmatprep.subr.bf16.mxu0 0
    %421 = vmatpush1.bf16.msra.mxu0 0
    %422 = vmatprep.subr.bf16.mxu0 0
    %423 = vmatpush1.bf16.msra.mxu0 0
    %424 = vmatprep.subr.bf16.mxu0 0
    %425 = vmatpush1.bf16.msra.mxu0 0
    %426 = vmatprep.mubr.bf16.mxu0 0
    %427 = vmatmul.mubr.bf16.gmra.mrb[0].mxu0 %v322
    %v428 = vpop.f32.mrb[0].mxu0
    %v429 = vadd.f32 %v344, %v428
    %v430 = vpop.f32.mrb[0].mxu0
    %v431 = vpop.f32.mrb[0].mxu0
    %v432 = vadd.f32 %v344, %v431
    %v433 = vpop.f32.mrb[0].mxu0
    %434 = vdwg.mxu0
    %vm435 = vcmp.gt.f32.partialorder %v429, 0.0
    %vm436 = vcmp.gt.f32.partialorder %v432, 0.0
    %v437 = vmul.f32 %v429, 1.442695
    %v438 = vpow.pop %v437
    %v439 = vmul.f32 %v432, 1.442695
    %v440 = vpow.pop %v439
    %v441 = vsub.f32 %v438, 1.0
    %v442 = vsub.f32 %v440, 1.0
    %v443 = vsel %vm435, %v429, %v441
    %v444 = vsel %vm436, %v432, %v442
    %v445 = vpack.c.bf16 %v444, %v443
    %v446 = vld [vmem:[#allocation11] sm:$0xf]
    %v447 = vld [vmem:[#allocation11 + $0x4] sm:$0xf]
    %v448 = vld [vmem:[#allocation11 + $0x8] sm:$0xf]
    %v449 = vld [vmem:[#allocation11 + $0xc] sm:$0xf]
    %v450 = vld [vmem:[#allocation11 + $0x10] sm:$0xf]
    %v451 = vld [vmem:[#allocation11 + $0x14] sm:$0xf]
    %v452 = vld [vmem:[#allocation11 + $0x18] sm:$0xf]
    %v453 = vld [vmem:[#allocation11 + $0x1c] sm:$0xf]
    %v454 = vld [vmem:[#allocation11 + $0x20] sm:$0xf]
    %v455 = vld [vmem:[#allocation11 + $0x24] sm:$0xf]
    %v456 = vld [vmem:[#allocation11 + $0x28] sm:$0xf]
    %v457 = vld [vmem:[#allocation11 + $0x2c] sm:$0xf]
    %v458 = vld [vmem:[#allocation11 + $0x30] sm:$0xf]
    %v459 = vld [vmem:[#allocation11 + $0x34] sm:$0xf]
    %v460 = vld [vmem:[#allocation11 + $0x38] sm:$0xf]
    %v461 = vld [vmem:[#allocation11 + $0x3c] sm:$0xf]
    %v462 = vld [vmem:[#allocation13] sm:$0x1]
    %v464 = vlaneseq
    %v465 = vshrl.u32 %v464, 7
    %v466 = vsub.s32 0, %v465
    %v467 = vrot.slane %v462, %v466
    %v485 = vunpack.c.l.b16 %v446
    %v486 = vunpack.c.l.b16 %v447
    %v487 = vunpack.c.l.b16 %v448
    %v488 = vunpack.c.l.b16 %v449
    %v489 = vunpack.c.l.b16 %v450
    %v490 = vunpack.c.l.b16 %v451
    %v491 = vunpack.c.l.b16 %v452
    %v492 = vunpack.c.l.b16 %v453
    %v493 = vunpack.c.l.b16 %v454
    %v494 = vunpack.c.l.b16 %v455
    %v495 = vunpack.c.l.b16 %v456
    %v496 = vunpack.c.l.b16 %v457
    %v497 = vunpack.c.l.b16 %v458
    %v498 = vunpack.c.l.b16 %v459
    %v499 = vunpack.c.l.b16 %v460
    %v500 = vunpack.c.l.b16 %v461
    %v501 = vpack.c.b16 %v486, %v485
    %v502 = vpack.c.b16 %v488, %v487
    %v503 = vpack.c.b16 %v490, %v489
    %v504 = vpack.c.b16 %v492, %v491
    %v505 = vpack.c.b16 %v494, %v493
    %v506 = vpack.c.b16 %v496, %v495
    %v507 = vpack.c.b16 %v498, %v497
    %v508 = vpack.c.b16 %v500, %v499
    %517 = vmatprep.subr.bf16.mxu0 0
    %518 = vmatpush1.bf16.msra.mxu0 %v501
    %519 = vmatprep.subr.bf16.mxu0 0
    %520 = vmatpush1.bf16.msra.mxu0 %v502
    %521 = vmatprep.subr.bf16.mxu0 0
    %522 = vmatpush1.bf16.msra.mxu0 %v503
    %523 = vmatprep.subr.bf16.mxu0 0
    %524 = vmatpush1.bf16.msra.mxu0 %v504
    %525 = vmatprep.subr.bf16.mxu0 0
    %526 = vmatpush1.bf16.msra.mxu0 %v505
    %527 = vmatprep.subr.bf16.mxu0 0
    %528 = vmatpush1.bf16.msra.mxu0 %v506
    %529 = vmatprep.subr.bf16.mxu0 0
    %530 = vmatpush1.bf16.msra.mxu0 %v507
    %531 = vmatprep.subr.bf16.mxu0 0
    %532 = vmatpush1.bf16.msra.mxu0 %v508
    %533 = vmatprep.subr.bf16.mxu0 0
    %534 = vmatpush1.bf16.msra.mxu0 0
    %535 = vmatprep.subr.bf16.mxu0 0
    %536 = vmatpush1.bf16.msra.mxu0 0
    %537 = vmatprep.subr.bf16.mxu0 0
    %538 = vmatpush1.bf16.msra.mxu0 0
    %539 = vmatprep.subr.bf16.mxu0 0
    %540 = vmatpush1.bf16.msra.mxu0 0
    %541 = vmatprep.subr.bf16.mxu0 0
    %542 = vmatpush1.bf16.msra.mxu0 0
    %543 = vmatprep.subr.bf16.mxu0 0
    %544 = vmatpush1.bf16.msra.mxu0 0
    %545 = vmatprep.subr.bf16.mxu0 0
    %546 = vmatpush1.bf16.msra.mxu0 0
    %547 = vmatprep.subr.bf16.mxu0 0
    %548 = vmatpush1.bf16.msra.mxu0 0
    %549 = vmatprep.mubr.bf16.mxu0 0
    %550 = vmatmul.mubr.bf16.gmra.mrb[0].mxu0 %v445
    %v551 = vpop.f32.mrb[0].mxu0
    %v552 = vadd.f32 %v467, %v551
    %v553 = vpop.f32.mrb[0].mxu0
    %v554 = vpop.f32.mrb[0].mxu0
    %v555 = vadd.f32 %v467, %v554
    %v556 = vpop.f32.mrb[0].mxu0
    %557 = vdwg.mxu0
    %v558 = vadd.f32 %v320, %v552
    %v559 = vadd.f32 %v321, %v555
    %vm560 = vcmp.gt.f32.partialorder %v558, 0.0
    %vm561 = vcmp.gt.f32.partialorder %v559, 0.0
    %v562 = vmul.f32 %v558, 1.442695
    %v563 = vpow.pop %v562
    %v564 = vmul.f32 %v559, 1.442695
    %v565 = vpow.pop %v564
    %v566 = vsub.f32 %v563, 1.0
    %v567 = vsub.f32 %v565, 1.0
    %v568 = vsel %vm560, %v558, %v566
    %v569 = vsel %vm561, %v559, %v567
    %v570 = vpack.c.bf16 %v569, %v568
    %v571 = vld [vmem:[#allocation14] sm:$0xf]
    %v572 = vld [vmem:[#allocation14 + $0x4] sm:$0xf]
    %v573 = vld [vmem:[#allocation14 + $0x8] sm:$0xf]
    %v574 = vld [vmem:[#allocation14 + $0xc] sm:$0xf]
    %v575 = vld [vmem:[#allocation14 + $0x10] sm:$0xf]
    %v576 = vld [vmem:[#allocation14 + $0x14] sm:$0xf]
    %v577 = vld [vmem:[#allocation14 + $0x18] sm:$0xf]
    %v578 = vld [vmem:[#allocation14 + $0x1c] sm:$0xf]
    %v579 = vld [vmem:[#allocation14 + $0x20] sm:$0xf]
    %v580 = vld [vmem:[#allocation14 + $0x24] sm:$0xf]
    %v581 = vld [vmem:[#allocation14 + $0x28] sm:$0xf]
    %v582 = vld [vmem:[#allocation14 + $0x2c] sm:$0xf]
    %v583 = vld [vmem:[#allocation14 + $0x30] sm:$0xf]
    %v584 = vld [vmem:[#allocation14 + $0x34] sm:$0xf]
    %v585 = vld [vmem:[#allocation14 + $0x38] sm:$0xf]
    %v586 = vld [vmem:[#allocation14 + $0x3c] sm:$0xf]
    %v587 = vld [vmem:[#allocation16] sm:$0x1]
    %v589 = vlaneseq
    %v590 = vshrl.u32 %v589, 7
    %v591 = vsub.s32 0, %v590
    %v592 = vrot.slane %v587, %v591
    %v610 = vunpack.c.l.b16 %v571
    %v611 = vunpack.c.l.b16 %v572
    %v612 = vunpack.c.l.b16 %v573
    %v613 = vunpack.c.l.b16 %v574
    %v614 = vunpack.c.l.b16 %v575
    %v615 = vunpack.c.l.b16 %v576
    %v616 = vunpack.c.l.b16 %v577
    %v617 = vunpack.c.l.b16 %v578
    %v618 = vunpack.c.l.b16 %v579
    %v619 = vunpack.c.l.b16 %v580
    %v620 = vunpack.c.l.b16 %v581
    %v621 = vunpack.c.l.b16 %v582
    %v622 = vunpack.c.l.b16 %v583
    %v623 = vunpack.c.l.b16 %v584
    %v624 = vunpack.c.l.b16 %v585
    %v625 = vunpack.c.l.b16 %v586
    %v626 = vpack.c.b16 %v611, %v610
    %v627 = vpack.c.b16 %v613, %v612
    %v628 = vpack.c.b16 %v615, %v614
    %v629 = vpack.c.b16 %v617, %v616
    %v630 = vpack.c.b16 %v619, %v618
    %v631 = vpack.c.b16 %v621, %v620
    %v632 = vpack.c.b16 %v623, %v622
    %v633 = vpack.c.b16 %v625, %v624
    %642 = vmatprep.subr.bf16.mxu0 0
    %643 = vmatpush1.bf16.msra.mxu0 %v626
    %644 = vmatprep.subr.bf16.mxu0 0
    %645 = vmatpush1.bf16.msra.mxu0 %v627
    %646 = vmatprep.subr.bf16.mxu0 0
    %647 = vmatpush1.bf16.msra.mxu0 %v628
    %648 = vmatprep.subr.bf16.mxu0 0
    %649 = vmatpush1.bf16.msra.mxu0 %v629
    %650 = vmatprep.subr.bf16.mxu0 0
    %651 = vmatpush1.bf16.msra.mxu0 %v630
    %652 = vmatprep.subr.bf16.mxu0 0
    %653 = vmatpush1.bf16.msra.mxu0 %v631
    %654 = vmatprep.subr.bf16.mxu0 0
    %655 = vmatpush1.bf16.msra.mxu0 %v632
    %656 = vmatprep.subr.bf16.mxu0 0
    %657 = vmatpush1.bf16.msra.mxu0 %v633
    %658 = vmatprep.subr.bf16.mxu0 0
    %659 = vmatpush1.bf16.msra.mxu0 0
    %660 = vmatprep.subr.bf16.mxu0 0
    %661 = vmatpush1.bf16.msra.mxu0 0
    %662 = vmatprep.subr.bf16.mxu0 0
    %663 = vmatpush1.bf16.msra.mxu0 0
    %664 = vmatprep.subr.bf16.mxu0 0
    %665 = vmatpush1.bf16.msra.mxu0 0
    %666 = vmatprep.subr.bf16.mxu0 0
    %667 = vmatpush1.bf16.msra.mxu0 0
    %668 = vmatprep.subr.bf16.mxu0 0
    %669 = vmatpush1.bf16.msra.mxu0 0
    %670 = vmatprep.subr.bf16.mxu0 0
    %671 = vmatpush1.bf16.msra.mxu0 0
    %672 = vmatprep.subr.bf16.mxu0 0
    %673 = vmatpush1.bf16.msra.mxu0 0
    %674 = vmatprep.mubr.bf16.mxu0 0
    %675 = vmatmul.mubr.bf16.gmra.mrb[0].mxu0 %v570
    %v676 = vpop.f32.mrb[0].mxu0
    %v677 = vadd.f32 %v592, %v676
    %v678 = vpop.f32.mrb[0].mxu0
    %v679 = vpop.f32.mrb[0].mxu0
    %v680 = vadd.f32 %v592, %v679
    %v681 = vpop.f32.mrb[0].mxu0
    %682 = vdwg.mxu0
    %vm683 = vcmp.gt.f32.partialorder %v677, 0.0
    %vm684 = vcmp.gt.f32.partialorder %v680, 0.0
    %v685 = vmul.f32 %v677, 1.442695
    %v686 = vpow.pop %v685
    %v687 = vmul.f32 %v680, 1.442695
    %v688 = vpow.pop %v687
    %v689 = vsub.f32 %v686, 1.0
    %v690 = vsub.f32 %v688, 1.0
    %v691 = vsel %vm683, %v677, %v689
    %v692 = vsel %vm684, %v680, %v690
    %v693 = vpack.c.bf16 %v692, %v691
    %v694 = vld [vmem:[#allocation17] sm:$0xf]
    %v695 = vld [vmem:[#allocation17 + $0x4] sm:$0xf]
    %v696 = vld [vmem:[#allocation17 + $0x8] sm:$0xf]
    %v697 = vld [vmem:[#allocation17 + $0xc] sm:$0xf]
    %v698 = vld [vmem:[#allocation17 + $0x10] sm:$0xf]
    %v699 = vld [vmem:[#allocation17 + $0x14] sm:$0xf]
    %v700 = vld [vmem:[#allocation17 + $0x18] sm:$0xf]
    %v701 = vld [vmem:[#allocation17 + $0x1c] sm:$0xf]
    %v702 = vld [vmem:[#allocation17 + $0x20] sm:$0xf]
    %v703 = vld [vmem:[#allocation17 + $0x24] sm:$0xf]
    %v704 = vld [vmem:[#allocation17 + $0x28] sm:$0xf]
    %v705 = vld [vmem:[#allocation17 + $0x2c] sm:$0xf]
    %v706 = vld [vmem:[#allocation17 + $0x30] sm:$0xf]
    %v707 = vld [vmem:[#allocation17 + $0x34] sm:$0xf]
    %v708 = vld [vmem:[#allocation17 + $0x38] sm:$0xf]
    %v709 = vld [vmem:[#allocation17 + $0x3c] sm:$0xf]
    %v710 = vld [vmem:[#allocation19] sm:$0x1]
    %v712 = vlaneseq
    %v713 = vshrl.u32 %v712, 7
    %v714 = vsub.s32 0, %v713
    %v715 = vrot.slane %v710, %v714
    %v733 = vunpack.c.l.b16 %v694
    %v734 = vunpack.c.l.b16 %v695
    %v735 = vunpack.c.l.b16 %v696
    %v736 = vunpack.c.l.b16 %v697
    %v737 = vunpack.c.l.b16 %v698
    %v738 = vunpack.c.l.b16 %v699
    %v739 = vunpack.c.l.b16 %v700
    %v740 = vunpack.c.l.b16 %v701
    %v741 = vunpack.c.l.b16 %v702
    %v742 = vunpack.c.l.b16 %v703
    %v743 = vunpack.c.l.b16 %v704
    %v744 = vunpack.c.l.b16 %v705
    %v745 = vunpack.c.l.b16 %v706
    %v746 = vunpack.c.l.b16 %v707
    %v747 = vunpack.c.l.b16 %v708
    %v748 = vunpack.c.l.b16 %v709
    %v749 = vpack.c.b16 %v734, %v733
    %v750 = vpack.c.b16 %v736, %v735
    %v751 = vpack.c.b16 %v738, %v737
    %v752 = vpack.c.b16 %v740, %v739
    %v753 = vpack.c.b16 %v742, %v741
    %v754 = vpack.c.b16 %v744, %v743
    %v755 = vpack.c.b16 %v746, %v745
    %v756 = vpack.c.b16 %v748, %v747
    %765 = vmatprep.subr.bf16.mxu0 0
    %766 = vmatpush1.bf16.msra.mxu0 %v749
    %767 = vmatprep.subr.bf16.mxu0 0
    %768 = vmatpush1.bf16.msra.mxu0 %v750
    %769 = vmatprep.subr.bf16.mxu0 0
    %770 = vmatpush1.bf16.msra.mxu0 %v751
    %771 = vmatprep.subr.bf16.mxu0 0
    %772 = vmatpush1.bf16.msra.mxu0 %v752
    %773 = vmatprep.subr.bf16.mxu0 0
    %774 = vmatpush1.bf16.msra.mxu0 %v753
    %775 = vmatprep.subr.bf16.mxu0 0
    %776 = vmatpush1.bf16.msra.mxu0 %v754
    %777 = vmatprep.subr.bf16.mxu0 0
    %778 = vmatpush1.bf16.msra.mxu0 %v755
    %779 = vmatprep.subr.bf16.mxu0 0
    %780 = vmatpush1.bf16.msra.mxu0 %v756
    %781 = vmatprep.subr.bf16.mxu0 0
    %782 = vmatpush1.bf16.msra.mxu0 0
    %783 = vmatprep.subr.bf16.mxu0 0
    %784 = vmatpush1.bf16.msra.mxu0 0
    %785 = vmatprep.subr.bf16.mxu0 0
    %786 = vmatpush1.bf16.msra.mxu0 0
    %787 = vmatprep.subr.bf16.mxu0 0
    %788 = vmatpush1.bf16.msra.mxu0 0
    %789 = vmatprep.subr.bf16.mxu0 0
    %790 = vmatpush1.bf16.msra.mxu0 0
    %791 = vmatprep.subr.bf16.mxu0 0
    %792 = vmatpush1.bf16.msra.mxu0 0
    %793 = vmatprep.subr.bf16.mxu0 0
    %794 = vmatpush1.bf16.msra.mxu0 0
    %795 = vmatprep.subr.bf16.mxu0 0
    %796 = vmatpush1.bf16.msra.mxu0 0
    %797 = vmatprep.mubr.bf16.mxu0 0
    %798 = vmatmul.mubr.bf16.gmra.mrb[0].mxu0 %v693
    %v799 = vpop.f32.mrb[0].mxu0
    %v800 = vadd.f32 %v715, %v799
    %v801 = vpop.f32.mrb[0].mxu0
    %v802 = vpop.f32.mrb[0].mxu0
    %v803 = vadd.f32 %v715, %v802
    %v804 = vpop.f32.mrb[0].mxu0
    %805 = vdwg.mxu0
    %v806 = vadd.f32 %v568, %v800
    %v807 = vadd.f32 %v569, %v803
    %vm808 = vcmp.gt.f32.partialorder %v806, 0.0
    %vm809 = vcmp.gt.f32.partialorder %v807, 0.0
    %v810 = vmul.f32 %v806, 1.442695
    %v811 = vpow.pop %v810
    %v812 = vmul.f32 %v807, 1.442695
    %v813 = vpow.pop %v812
    %v814 = vsub.f32 %v811, 1.0
    %v815 = vsub.f32 %v813, 1.0
    %v816 = vsel %vm808, %v806, %v814
    %v817 = vsel %vm809, %v807, %v815
    %v818 = vpack.c.bf16 %v817, %v816
    %v819 = vld [vmem:[#allocation20] sm:$0xf]
    %v820 = vld [vmem:[#allocation20 + $0x4] sm:$0xf]
    %v821 = vld [vmem:[#allocation20 + $0x8] sm:$0xf]
    %v822 = vld [vmem:[#allocation20 + $0xc] sm:$0xf]
    %v823 = vld [vmem:[#allocation20 + $0x10] sm:$0xf]
    %v824 = vld [vmem:[#allocation20 + $0x14] sm:$0xf]
    %v825 = vld [vmem:[#allocation20 + $0x18] sm:$0xf]
    %v826 = vld [vmem:[#allocation20 + $0x1c] sm:$0xf]
    %v827 = vld [vmem:[#allocation20 + $0x20] sm:$0xf]
    %v828 = vld [vmem:[#allocation20 + $0x24] sm:$0xf]
    %v829 = vld [vmem:[#allocation20 + $0x28] sm:$0xf]
    %v830 = vld [vmem:[#allocation20 + $0x2c] sm:$0xf]
    %v831 = vld [vmem:[#allocation20 + $0x30] sm:$0xf]
    %v832 = vld [vmem:[#allocation20 + $0x34] sm:$0xf]
    %v833 = vld [vmem:[#allocation20 + $0x38] sm:$0xf]
    %v834 = vld [vmem:[#allocation20 + $0x3c] sm:$0xf]
    %v835 = vld [vmem:[#allocation22] sm:$0x1]
    %v837 = vlaneseq
    %v838 = vshrl.u32 %v837, 7
    %v839 = vsub.s32 0, %v838
    %v840 = vrot.slane %v835, %v839
    %v858 = vunpack.c.l.b16 %v819
    %v859 = vunpack.c.l.b16 %v820
    %v860 = vunpack.c.l.b16 %v821
    %v861 = vunpack.c.l.b16 %v822
    %v862 = vunpack.c.l.b16 %v823
    %v863 = vunpack.c.l.b16 %v824
    %v864 = vunpack.c.l.b16 %v825
    %v865 = vunpack.c.l.b16 %v826
    %v866 = vunpack.c.l.b16 %v827
    %v867 = vunpack.c.l.b16 %v828
    %v868 = vunpack.c.l.b16 %v829
    %v869 = vunpack.c.l.b16 %v830
    %v870 = vunpack.c.l.b16 %v831
    %v871 = vunpack.c.l.b16 %v832
    %v872 = vunpack.c.l.b16 %v833
    %v873 = vunpack.c.l.b16 %v834
    %v874 = vpack.c.b16 %v859, %v858
    %v875 = vpack.c.b16 %v861, %v860
    %v876 = vpack.c.b16 %v863, %v862
    %v877 = vpack.c.b16 %v865, %v864
    %v878 = vpack.c.b16 %v867, %v866
    %v879 = vpack.c.b16 %v869, %v868
    %v880 = vpack.c.b16 %v871, %v870
    %v881 = vpack.c.b16 %v873, %v872
    %890 = vmatprep.subr.bf16.mxu0 0
    %891 = vmatpush1.bf16.msra.mxu0 %v874
    %892 = vmatprep.subr.bf16.mxu0 0
    %893 = vmatpush1.bf16.msra.mxu0 %v875
    %894 = vmatprep.subr.bf16.mxu0 0
    %895 = vmatpush1.bf16.msra.mxu0 %v876
    %896 = vmatprep.subr.bf16.mxu0 0
    %897 = vmatpush1.bf16.msra.mxu0 %v877
    %898 = vmatprep.subr.bf16.mxu0 0
    %899 = vmatpush1.bf16.msra.mxu0 %v878
    %900 = vmatprep.subr.bf16.mxu0 0
    %901 = vmatpush1.bf16.msra.mxu0 %v879
    %902 = vmatprep.subr.bf16.mxu0 0
    %903 = vmatpush1.bf16.msra.mxu0 %v880
    %904 = vmatprep.subr.bf16.mxu0 0
    %905 = vmatpush1.bf16.msra.mxu0 %v881
    %906 = vmatprep.subr.bf16.mxu0 0
    %907 = vmatpush1.bf16.msra.mxu0 0
    %908 = vmatprep.subr.bf16.mxu0 0
    %909 = vmatpush1.bf16.msra.mxu0 0
    %910 = vmatprep.subr.bf16.mxu0 0
    %911 = vmatpush1.bf16.msra.mxu0 0
    %912 = vmatprep.subr.bf16.mxu0 0
    %913 = vmatpush1.bf16.msra.mxu0 0
    %914 = vmatprep.subr.bf16.mxu0 0
    %915 = vmatpush1.bf16.msra.mxu0 0
    %916 = vmatprep.subr.bf16.mxu0 0
    %917 = vmatpush1.bf16.msra.mxu0 0
    %918 = vmatprep.subr.bf16.mxu0 0
    %919 = vmatpush1.bf16.msra.mxu0 0
    %920 = vmatprep.subr.bf16.mxu0 0
    %921 = vmatpush1.bf16.msra.mxu0 0
    %922 = vmatprep.mubr.bf16.mxu0 0
    %923 = vmatmul.mubr.bf16.gmra.mrb[0].mxu0 %v818
    %v924 = vpop.f32.mrb[0].mxu0
    %v925 = vadd.f32 %v840, %v924
    %v926 = vpop.f32.mrb[0].mxu0
    %v927 = vpop.f32.mrb[0].mxu0
    %v928 = vadd.f32 %v840, %v927
    %v929 = vpop.f32.mrb[0].mxu0
    %930 = vdwg.mxu0
    %vm931 = vcmp.gt.f32.partialorder %v925, 0.0
    %vm932 = vcmp.gt.f32.partialorder %v928, 0.0
    %v933 = vmul.f32 %v925, 1.442695
    %v934 = vpow.pop %v933
    %v935 = vmul.f32 %v928, 1.442695
    %v936 = vpow.pop %v935
    %v937 = vsub.f32 %v934, 1.0
    %v938 = vsub.f32 %v936, 1.0
    %v939 = vsel %vm931, %v925, %v937
    %v940 = vsel %vm932, %v928, %v938
    %v941 = vpack.c.bf16 %v940, %v939
    %v942 = vld [vmem:[#allocation23] sm:$0xf]
    %v943 = vld [vmem:[#allocation23 + $0x4] sm:$0xf]
    %v944 = vld [vmem:[#allocation23 + $0x8] sm:$0xf]
    %v945 = vld [vmem:[#allocation23 + $0xc] sm:$0xf]
    %v946 = vld [vmem:[#allocation23 + $0x10] sm:$0xf]
    %v947 = vld [vmem:[#allocation23 + $0x14] sm:$0xf]
    %v948 = vld [vmem:[#allocation23 + $0x18] sm:$0xf]
    %v949 = vld [vmem:[#allocation23 + $0x1c] sm:$0xf]
    %v950 = vld [vmem:[#allocation23 + $0x20] sm:$0xf]
    %v951 = vld [vmem:[#allocation23 + $0x24] sm:$0xf]
    %v952 = vld [vmem:[#allocation23 + $0x28] sm:$0xf]
    %v953 = vld [vmem:[#allocation23 + $0x2c] sm:$0xf]
    %v954 = vld [vmem:[#allocation23 + $0x30] sm:$0xf]
    %v955 = vld [vmem:[#allocation23 + $0x34] sm:$0xf]
    %v956 = vld [vmem:[#allocation23 + $0x38] sm:$0xf]
    %v957 = vld [vmem:[#allocation23 + $0x3c] sm:$0xf]
    %v958 = vld [vmem:[#allocation25] sm:$0x1]
    %v960 = vlaneseq
    %v961 = vshrl.u32 %v960, 7
    %v962 = vsub.s32 0, %v961
    %v963 = vrot.slane %v958, %v962
    %v981 = vunpack.c.l.b16 %v942
    %v982 = vunpack.c.l.b16 %v943
    %v983 = vunpack.c.l.b16 %v944
    %v984 = vunpack.c.l.b16 %v945
    %v985 = vunpack.c.l.b16 %v946
    %v986 = vunpack.c.l.b16 %v947
    %v987 = vunpack.c.l.b16 %v948
    %v988 = vunpack.c.l.b16 %v949
    %v989 = vunpack.c.l.b16 %v950
    %v990 = vunpack.c.l.b16 %v951
    %v991 = vunpack.c.l.b16 %v952
    %v992 = vunpack.c.l.b16 %v953
    %v993 = vunpack.c.l.b16 %v954
    %v994 = vunpack.c.l.b16 %v955
    %v995 = vunpack.c.l.b16 %v956
    %v996 = vunpack.c.l.b16 %v957
    %v997 = vpack.c.b16 %v982, %v981
    %v998 = vpack.c.b16 %v984, %v983
    %v999 = vpack.c.b16 %v986, %v985
    %v1000 = vpack.c.b16 %v988, %v987
    %v1001 = vpack.c.b16 %v990, %v989
    %v1002 = vpack.c.b16 %v992, %v991
    %v1003 = vpack.c.b16 %v994, %v993
    %v1004 = vpack.c.b16 %v996, %v995
    %1013 = vmatprep.subr.bf16.mxu0 0
    %1014 = vmatpush1.bf16.msra.mxu0 %v997
    %1015 = vmatprep.subr.bf16.mxu0 0
    %1016 = vmatpush1.bf16.msra.mxu0 %v998
    %1017 = vmatprep.subr.bf16.mxu0 0
    %1018 = vmatpush1.bf16.msra.mxu0 %v999
    %1019 = vmatprep.subr.bf16.mxu0 0
    %1020 = vmatpush1.bf16.msra.mxu0 %v1000
    %1021 = vmatprep.subr.bf16.mxu0 0
    %1022 = vmatpush1.bf16.msra.mxu0 %v1001
    %1023 = vmatprep.subr.bf16.mxu0 0
    %1024 = vmatpush1.bf16.msra.mxu0 %v1002
    %1025 = vmatprep.subr.bf16.mxu0 0
    %1026 = vmatpush1.bf16.msra.mxu0 %v1003
    %1027 = vmatprep.subr.bf16.mxu0 0
    %1028 = vmatpush1.bf16.msra.mxu0 %v1004
    %1029 = vmatprep.subr.bf16.mxu0 0
    %1030 = vmatpush1.bf16.msra.mxu0 0
    %1031 = vmatprep.subr.bf16.mxu0 0
    %1032 = vmatpush1.bf16.msra.mxu0 0
    %1033 = vmatprep.subr.bf16.mxu0 0
    %1034 = vmatpush1.bf16.msra.mxu0 0
    %1035 = vmatprep.subr.bf16.mxu0 0
    %1036 = vmatpush1.bf16.msra.mxu0 0
    %1037 = vmatprep.subr.bf16.mxu0 0
    %1038 = vmatpush1.bf16.msra.mxu0 0
    %1039 = vmatprep.subr.bf16.mxu0 0
    %1040 = vmatpush1.bf16.msra.mxu0 0
    %1041 = vmatprep.subr.bf16.mxu0 0
    %1042 = vmatpush1.bf16.msra.mxu0 0
    %1043 = vmatprep.subr.bf16.mxu0 0
    %1044 = vmatpush1.bf16.msra.mxu0 0
    %1045 = vmatprep.mubr.bf16.mxu0 0
    %1046 = vmatmul.mubr.bf16.gmra.mrb[0].mxu0 %v941
    %v1047 = vpop.f32.mrb[0].mxu0
    %v1048 = vadd.f32 %v963, %v1047
    %v1049 = vpop.f32.mrb[0].mxu0
    %v1050 = vpop.f32.mrb[0].mxu0
    %v1051 = vadd.f32 %v963, %v1050
    %v1052 = vpop.f32.mrb[0].mxu0
    %1053 = vdwg.mxu0
    %v1054 = vadd.f32 %v816, %v1048
    %v1055 = vadd.f32 %v817, %v1051
    %1056 = vst [vmem:[#allocation26] sm:$0xff] %v1054
    %1057 = vst [vmem:[#allocation26 + $0x8] sm:$0xff] %v1055
    // Predicated region
    $region122: #{tpu_custom_call.1} parent=1 // pred_check
      _
    $region123: #{tpu_custom_call.1} parent=1 // pred_check_branch
      %1059 = sbr.rel (0) target = $region125
    $region124: #{tpu_custom_call.1} parent=1 // pred_region
      %s1061 = ssub.s32 256, 256
      %1062 = vsyncadd [#allocation4], %s1061
      %s1063 = sshll.u32 [#allocation26], 4
      %s1064 = int_to_ptr.vmem [resolvable:$true] %s1063
      %1069 = dma.vmem_to_hbm [thread:$0]  %s1064, 256, %s15, [#allocation4], 128, 128, 8
    $region125: #{tpu_custom_call.1} parent=1 // pred_fallthru
      _
    // Predicated region
    $region126: #{tpu_custom_call.1} parent=1 // pred_check
      _
    $region127: #{tpu_custom_call.1} parent=1 // pred_check_branch
      %1071 = sbr.rel (0) target = $region129
    $region128: #{tpu_custom_call.1} parent=1 // pred_region
      %1072 = dma.done [#allocation4], 256
    $region129: #{tpu_custom_call.1} parent=1 // pred_fallthru
      _
    %1073 = vsyncpa [#allocation3], 1
    %1074 = vsyncpa [#allocation6], 1
    %1075 = vsyncpa [#allocation9], 1
    %1076 = vsyncpa [#allocation12], 1
    %1077 = vsyncpa [#allocation15], 1
    %1078 = vsyncpa [#allocation18], 1
    %1079 = vsyncpa [#allocation21], 1
    %1080 = vsyncpa [#allocation24], 1
    %1081 = vsyncpa [#allocation4], 1

// kernel: tpu_custom_call.1
$region0: #{tpu_custom_call.1}
  #allocation0 [shape = 'u32[]', space=smem, size = 0x4, offset = 0x4, fixed_abs, tag = 'smem constant byte address 0x4 - core index']
  #allocation1 [shape = 'u32[144,128]{1,0:T(1,128)}', space=vmem, size = 0x12000, scoped, tag = 'internal scratch']
  %s0 = inlined_call_operand.hbm [shape: f32[16,32], index: 0, kind: input, shape index: {}]
  %s1 = inlined_call_operand.hbm [shape: bf16[32,128], index: 1, kind: input, shape index: {}]
  %s2 = inlined_call_operand.hbm [shape: f32[1,128], index: 2, kind: input, shape index: {}]
  %s3 = inlined_call_operand.hbm [shape: bf16[128,128], index: 3, kind: input, shape index: {}]
  %s4 = inlined_call_operand.hbm [shape: f32[1,128], index: 4, kind: input, shape index: {}]
  %s5 = inlined_call_operand.hbm [shape: bf16[128,128], index: 5, kind: input, shape index: {}]
  %s6 = inlined_call_operand.hbm [shape: f32[1,128], index: 6, kind: input, shape index: {}]
  %s7 = inlined_call_operand.hbm [shape: bf16[128,128], index: 7, kind: input, shape index: {}]
  %s8 = inlined_call_operand.hbm [shape: f32[1,128], index: 8, kind: input, shape index: {}]
  %s9 = inlined_call_operand.hbm [shape: bf16[128,128], index: 9, kind: input, shape index: {}]
  %s10 = inlined_call_operand.hbm [shape: f32[1,128], index: 10, kind: input, shape index: {}]
  %s11 = inlined_call_operand.hbm [shape: bf16[128,128], index: 11, kind: input, shape index: {}]
  %s12 = inlined_call_operand.hbm [shape: f32[1,128], index: 12, kind: input, shape index: {}]
  %s13 = inlined_call_operand.hbm [shape: bf16[128,128], index: 13, kind: input, shape index: {}]
  %s14 = inlined_call_operand.hbm [shape: f32[1,128], index: 14, kind: input, shape index: {}]
  %s15 = inlined_call_operand.hbm [shape: f32[16,128], index: 15, kind: output, shape index: {}]
  %s16 = sld [smem:[#allocation0]]
  $region130: #{tpu_custom_call.1} parent=0
    _
  %s18 = ssub.s32 1, %s16
  %s19 = scalar_select 0, %s18, %s16
  $region1: #{tpu_custom_call.1} parent=0
    #allocation2 [shape = 'u8[8192]{0}', space=vmem, size = 0x2000, scoped, tag = 'input window, operand 0, single buffered']
    #allocation3 [shape = 's32[1]{0}', space=sflag, size = 0x4, scoped, tag = 'scoped memory for tpu_custom_call.1']
    #allocation4 [shape = 's32[1]{0}', space=sflag, size = 0x4, scoped, tag = 'scoped memory for tpu_custom_call.1']
    #allocation5 [shape = 'u8[8192]{0}', space=vmem, size = 0x2000, scoped, tag = 'input window, operand 1, single buffered']
    #allocation6 [shape = 's32[1]{0}', space=sflag, size = 0x4, scoped, tag = 'scoped memory for tpu_custom_call.1']
    #allocation7 [shape = 'u8[512]{0}', space=vmem, size = 0x400, scoped, tag = 'input window, operand 2, single buffered']
    #allocation8 [shape = 'u8[32768]{0}', space=vmem, size = 0x8000, scoped, tag = 'input window, operand 3, single buffered']
    #allocation9 [shape = 's32[1]{0}', space=sflag, size = 0x4, scoped, tag = 'scoped memory for tpu_custom_call.1']
    #allocation10 [shape = 'u8[512]{0}', space=vmem, size = 0x400, scoped, tag = 'input window, operand 4, single buffered']
    #allocation11 [shape = 'u8[32768]{0}', space=vmem, size = 0x8000, scoped, tag = 'input window, operand 5, single buffered']
    #allocation12 [shape = 's32[1]{0}', space=sflag, size = 0x4, scoped, tag = 'scoped memory for tpu_custom_call.1']
    #allocation13 [shape = 'u8[512]{0}', space=vmem, size = 0x400, scoped, tag = 'input window, operand 6, single buffered']
    #allocation14 [shape = 'u8[32768]{0}', space=vmem, size = 0x8000, scoped, tag = 'input window, operand 7, single buffered']
    #allocation15 [shape = 's32[1]{0}', space=sflag, size = 0x4, scoped, tag = 'scoped memory for tpu_custom_call.1']
    #allocation16 [shape = 'u8[512]{0}', space=vmem, size = 0x400, scoped, tag = 'input window, operand 8, single buffered']
    #allocation17 [shape = 'u8[32768]{0}', space=vmem, size = 0x8000, scoped, tag = 'input window, operand 9, single buffered']
    #allocation18 [shape = 's32[1]{0}', space=sflag, size = 0x4, scoped, tag = 'scoped memory for tpu_custom_call.1']
    #allocation19 [shape = 'u8[512]{0}', space=vmem, size = 0x400, scoped, tag = 'input window, operand 10, single buffered']
    #allocation20 [shape = 'u8[32768]{0}', space=vmem, size = 0x8000, scoped, tag = 'input window, operand 11, single buffered']
    #allocation21 [shape = 's32[1]{0}', space=sflag, size = 0x4, scoped, tag = 'scoped memory for tpu_custom_call.1']
    #allocation22 [shape = 'u8[512]{0}', space=vmem, size = 0x400, scoped, tag = 'input window, operand 12, single buffered']
    #allocation23 [shape = 'u8[32768]{0}', space=vmem, size = 0x8000, scoped, tag = 'input window, operand 13, single buffered']
    #allocation24 [shape = 's32[1]{0}', space=sflag, size = 0x4, scoped, tag = 'scoped memory for tpu_custom_call.1']
    #allocation25 [shape = 'u8[512]{0}', space=vmem, size = 0x400, scoped, tag = 'input window, operand 14, single buffered']
    #allocation26 [shape = 'u8[8192]{0}', space=vmem, size = 0x2000, scoped, tag = 'output window, operand 0, single buffered']
    %20 = vsyncpa [#allocation3], 0
    %21 = vsyncpa [#allocation6], 0
    %22 = vsyncpa [#allocation9], 0
    %23 = vsyncpa [#allocation12], 0
    %24 = vsyncpa [#allocation15], 0
    %25 = vsyncpa [#allocation18], 0
    %26 = vsyncpa [#allocation21], 0
    %27 = vsyncpa [#allocation24], 0
    %28 = vsyncpa [#allocation4], 0
    // Predicated region
    $region2: #{tpu_custom_call.1} parent=1 // pred_check
      _
    $region3: #{tpu_custom_call.1} parent=1 // pred_check_branch
      %30 = sbr.rel (0) target = $region5
    $region4: #{tpu_custom_call.1} parent=1 // pred_region
      %s32 = ssub.s32 256, 256
      %33 = vsyncadd [#allocation3], %s32
      %s34 = sshll.u32 [#allocation2], 4
      %s35 = int_to_ptr.vmem [resolvable:$true] %s34
      %40 = dma.hbm_to_vmem [thread:$0]  %s0, 256, %s35, [#allocation3], 128, 128, 8
    $region5: #{tpu_custom_call.1} parent=1 // pred_fallthru
      _
    // Predicated region
    $region6: #{tpu_custom_call.1} parent=1 // pred_check
      _
    $region7: #{tpu_custom_call.1} parent=1 // pred_check_branch
      %42 = sbr.rel (0) target = $region9
    $region8: #{tpu_custom_call.1} parent=1 // pred_region
      %s44 = ssub.s32 256, 256
      %45 = vsyncadd [#allocation6], %s44
      %s46 = sshll.u32 [#allocation5], 4
      %s47 = int_to_ptr.vmem [resolvable:$true] %s46
      %52 = dma.hbm_to_vmem [thread:$0]  %s1, 256, %s47, [#allocation6], 64, 64, 4
    $region9: #{tpu_custom_call.1} parent=1 // pred_fallthru
      _
    // Predicated region
    $region10: #{tpu_custom_call.1} parent=1 // pred_check
      _
    $region11: #{tpu_custom_call.1} parent=1 // pred_check_branch
      %54 = sbr.rel (0) target = $region13
    $region12: #{tpu_custom_call.1} parent=1 // pred_region
      %s56 = ssub.s32 16, 16
      %57 = vsyncadd [#allocation6], %s56
      %s59 = sshll.u32 [#allocation7], 4
      %s60 = int_to_ptr.vmem [resolvable:$true] %s59
      %62 = dma.hbm_to_vmem [thread:$0]  %s2, 16, %s60, [#allocation6]
    $region13: #{tpu_custom_call.1} parent=1 // pred_fallthru
      _
    // Predicated region
    $region14: #{tpu_custom_call.1} parent=1 // pred_check
      _
    $region15: #{tpu_custom_call.1} parent=1 // pred_check_branch
      %64 = sbr.rel (0) target = $region17
    $region16: #{tpu_custom_call.1} parent=1 // pred_region
      %s66 = ssub.s32 1024, 1024
      %67 = vsyncadd [#allocation9], %s66
      %s68 = sshll.u32 [#allocation8], 4
      %s69 = int_to_ptr.vmem [resolvable:$true] %s68
      %74 = dma.hbm_to_vmem [thread:$0]  %s3, 1024, %s69, [#allocation9], 64, 64, 4
    $region17: #{tpu_custom_call.1} parent=1 // pred_fallthru
      _
    // Predicated region
    $region18: #{tpu_custom_call.1} parent=1 // pred_check
      _
    $region19: #{tpu_custom_call.1} parent=1 // pred_check_branch
      %76 = sbr.rel (0) target = $region21
    $region20: #{tpu_custom_call.1} parent=1 // pred_region
      %s78 = ssub.s32 16, 16
      %79 = vsyncadd [#allocation9], %s78
      %s81 = sshll.u32 [#allocation10], 4
      %s82 = int_to_ptr.vmem [resolvable:$true] %s81
      %84 = dma.hbm_to_vmem [thread:$0]  %s4, 16, %s82, [#allocation9]
    $region21: #{tpu_custom_call.1} parent=1 // pred_fallthru
      _
    // Predicated region
    $region22: #{tpu_custom_call.1} parent=1 // pred_check
      _
    $region23: #{tpu_custom_call.1} parent=1 // pred_check_branch
      %86 = sbr.rel (0) target = $region25
    $region24: #{tpu_custom_call.1} parent=1 // pred_region
      %s88 = ssub.s32 1024, 1024
      %89 = vsyncadd [#allocation12], %s88
      %s90 = sshll.u32 [#allocation11], 4
      %s91 = int_to_ptr.vmem [resolvable:$true] %s90
      %96 = dma.hbm_to_vmem [thread:$0]  %s5, 1024, %s91, [#allocation12], 64, 64, 4
    $region25: #{tpu_custom_call.1} parent=1 // pred_fallthru
      _
    // Predicated region
    $region26: #{tpu_custom_call.1} parent=1 // pred_check
      _
    $region27: #{tpu_custom_call.1} parent=1 // pred_check_branch
      %98 = sbr.rel (0) target = $region29
    $region28: #{tpu_custom_call.1} parent=1 // pred_region
      %s100 = ssub.s32 16, 16
      %101 = vsyncadd [#allocation12], %s100
      %s103 = sshll.u32 [#allocation13], 4
      %s104 = int_to_ptr.vmem [resolvable:$true] %s103
      %106 = dma.hbm_to_vmem [thread:$0]  %s6, 16, %s104, [#allocation12]
    $region29: #{tpu_custom_call.1} parent=1 // pred_fallthru
      _
    // Predicated region
    $region30: #{tpu_custom_call.1} parent=1 // pred_check
      _
    $region31: #{tpu_custom_call.1} parent=1 // pred_check_branch
      %108 = sbr.rel (0) target = $region33
    $region32: #{tpu_custom_call.1} parent=1 // pred_region
      %s110 = ssub.s32 1024, 1024
      %111 = vsyncadd [#allocation15], %s110
      %s112 = sshll.u32 [#allocation14], 4
      %s113 = int_to_ptr.vmem [resolvable:$true] %s112
      %118 = dma.hbm_to_vmem [thread:$0]  %s7, 1024, %s113, [#allocation15], 64, 64, 4
    $region33: #{tpu_custom_call.1} parent=1 // pred_fallthru
      _
    // Predicated region
    $region34: #{tpu_custom_call.1} parent=1 // pred_check
      _
    $region35: #{tpu_custom_call.1} parent=1 // pred_check_branch
      %120 = sbr.rel (0) target = $region37
    $region36: #{tpu_custom_call.1} parent=1 // pred_region
      %s122 = ssub.s32 16, 16
      %123 = vsyncadd [#allocation15], %s122
      %s125 = sshll.u32 [#allocation16], 4
      %s126 = int_to_ptr.vmem [resolvable:$true] %s125
      %128 = dma.hbm_to_vmem [thread:$0]  %s8, 16, %s126, [#allocation15]
    $region37: #{tpu_custom_call.1} parent=1 // pred_fallthru
      _
    // Predicated region
    $region38: #{tpu_custom_call.1} parent=1 // pred_check
      _
    $region39: #{tpu_custom_call.1} parent=1 // pred_check_branch
      %130 = sbr.rel (0) target = $region41
    $region40: #{tpu_custom_call.1} parent=1 // pred_region
      %s132 = ssub.s32 1024, 1024
      %133 = vsyncadd [#allocation18], %s132
      %s134 = sshll.u32 [#allocation17], 4
      %s135 = int_to_ptr.vmem [resolvable:$true] %s134
      %140 = dma.hbm_to_vmem [thread:$0]  %s9, 1024, %s135, [#allocation18], 64, 64, 4
    $region41: #{tpu_custom_call.1} parent=1 // pred_fallthru
      _
    // Predicated region
    $region42: #{tpu_custom_call.1} parent=1 // pred_check
      _
    $region43: #{tpu_custom_call.1} parent=1 // pred_check_branch
      %142 = sbr.rel (0) target = $region45
    $region44: #{tpu_custom_call.1} parent=1 // pred_region
      %s144 = ssub.s32 16, 16
      %145 = vsyncadd [#allocation18], %s144
      %s147 = sshll.u32 [#allocation19], 4
      %s148 = int_to_ptr.vmem [resolvable:$true] %s147
      %150 = dma.hbm_to_vmem [thread:$0]  %s10, 16, %s148, [#allocation18]
    $region45: #{tpu_custom_call.1} parent=1 // pred_fallthru
      _
    // Predicated region
    $region46: #{tpu_custom_call.1} parent=1 // pred_check
      _
    $region47: #{tpu_custom_call.1} parent=1 // pred_check_branch
      %152 = sbr.rel (0) target = $region49
    $region48: #{tpu_custom_call.1} parent=1 // pred_region
      %s154 = ssub.s32 1024, 1024
      %155 = vsyncadd [#allocation21], %s154
      %s156 = sshll.u32 [#allocation20], 4
      %s157 = int_to_ptr.vmem [resolvable:$true] %s156
      %162 = dma.hbm_to_vmem [thread:$0]  %s11, 1024, %s157, [#allocation21], 64, 64, 4
    $region49: #{tpu_custom_call.1} parent=1 // pred_fallthru
      _
    // Predicated region
    $region50: #{tpu_custom_call.1} parent=1 // pred_check
      _
    $region51: #{tpu_custom_call.1} parent=1 // pred_check_branch
      %164 = sbr.rel (0) target = $region53
    $region52: #{tpu_custom_call.1} parent=1 // pred_region
      %s166 = ssub.s32 16, 16
      %167 = vsyncadd [#allocation21], %s166
      %s169 = sshll.u32 [#allocation22], 4
      %s170 = int_to_ptr.vmem [resolvable:$true] %s169
      %172 = dma.hbm_to_vmem [thread:$0]  %s12, 16, %s170, [#allocation21]
    $region53: #{tpu_custom_call.1} parent=1 // pred_fallthru
      _
    // Predicated region
    $region54: #{tpu_custom_call.1} parent=1 // pred_check
      _
    $region55: #{tpu_custom_call.1} parent=1 // pred_check_branch
      %174 = sbr.rel (0) target = $region57
    $region56: #{tpu_custom_call.1} parent=1 // pred_region
      %s176 = ssub.s32 1024, 1024
      %177 = vsyncadd [#allocation24], %s176
      %s178 = sshll.u32 [#allocation23], 4
      %s179 = int_to_ptr.vmem [resolvable:$true] %s178
      %184 = dma.hbm_to_vmem [thread:$0]  %s13, 1024, %s179, [#allocation24], 64, 64, 4
    $region57: #{tpu_custom_call.1} parent=1 // pred_fallthru
      _
    // Predicated region
    $region58: #{tpu_custom_call.1} parent=1 // pred_check
      _
    $region59: #{tpu_custom_call.1} parent=1 // pred_check_branch
      %186 = sbr.rel (0) target = $region61
    $region60: #{tpu_custom_call.1} parent=1 // pred_region
      %s188 = ssub.s32 16, 16
      %189 = vsyncadd [#allocation24], %s188
      %s191 = sshll.u32 [#allocation25], 4
      %s192 = int_to_ptr.vmem [resolvable:$true] %s191
      %194 = dma.hbm_to_vmem [thread:$0]  %s14, 16, %s192, [#allocation24]
    $region61: #{tpu_custom_call.1} parent=1 // pred_fallthru
      _
    // Predicated region
    $region62: #{tpu_custom_call.1} parent=1 // pred_check
      _
    $region63: #{tpu_custom_call.1} parent=1 // pred_check_branch
      %196 = sbr.rel (0) target = $region65
    $region64: #{tpu_custom_call.1} parent=1 // pred_region
      %197 = dma.done [#allocation3], 256
    $region65: #{tpu_custom_call.1} parent=1 // pred_fallthru
      _
    // Predicated region
    $region66: #{tpu_custom_call.1} parent=1 // pred_check
      _
    $region67: #{tpu_custom_call.1} parent=1 // pred_check_branch
      %199 = sbr.rel (0) target = $region69
    $region68: #{tpu_custom_call.1} parent=1 // pred_region
      %200 = dma.done [#allocation6], 256
    $region69: #{tpu_custom_call.1} parent=1 // pred_fallthru
      _
    // Predicated region
    $region70: #{tpu_custom_call.1} parent=1 // pred_check
      _
    $region71: #{tpu_custom_call.1} parent=1 // pred_check_branch
      %202 = sbr.rel (0) target = $region73
    $region72: #{tpu_custom_call.1} parent=1 // pred_region
      %203 = dma.done [#allocation6], 16
    $region73: #{tpu_custom_call.1} parent=1 // pred_fallthru
      _
    // Predicated region
    $region74: #{tpu_custom_call.1} parent=1 // pred_check
      _
    $region75: #{tpu_custom_call.1} parent=1 // pred_check_branch
      %205 = sbr.rel (0) target = $region77
    $region76: #{tpu_custom_call.1} parent=1 // pred_region
      %206 = dma.done [#allocation9], 1024
    $region77: #{tpu_custom_call.1} parent=1 // pred_fallthru
      _
    // Predicated region
    $region78: #{tpu_custom_call.1} parent=1 // pred_check
      _
    $region79: #{tpu_custom_call.1} parent=1 // pred_check_branch
      %208 = sbr.rel (0) target = $region81
    $region80: #{tpu_custom_call.1} parent=1 // pred_region
      %209 = dma.done [#allocation9], 16
    $region81: #{tpu_custom_call.1} parent=1 // pred_fallthru
      _
    // Predicated region
    $region82: #{tpu_custom_call.1} parent=1 // pred_check
      _
    $region83: #{tpu_custom_call.1} parent=1 // pred_check_branch
      %211 = sbr.rel (0) target = $region85
    $region84: #{tpu_custom_call.1} parent=1 // pred_region
      %212 = dma.done [#allocation12], 1024
    $region85: #{tpu_custom_call.1} parent=1 // pred_fallthru
      _
    // Predicated region
    $region86: #{tpu_custom_call.1} parent=1 // pred_check
      _
    $region87: #{tpu_custom_call.1} parent=1 // pred_check_branch
      %214 = sbr.rel (0) target = $region89
    $region88: #{tpu_custom_call.1} parent=1 // pred_region
      %215 = dma.done [#allocation12], 16
    $region89: #{tpu_custom_call.1} parent=1 // pred_fallthru
      _
    // Predicated region
    $region90: #{tpu_custom_call.1} parent=1 // pred_check
      _
    $region91: #{tpu_custom_call.1} parent=1 // pred_check_branch
      %217 = sbr.rel (0) target = $region93
    $region92: #{tpu_custom_call.1} parent=1 // pred_region
      %218 = dma.done [#allocation15], 1024
    $region93: #{tpu_custom_call.1} parent=1 // pred_fallthru
      _
    // Predicated region
    $region94: #{tpu_custom_call.1} parent=1 // pred_check
      _
    $region95: #{tpu_custom_call.1} parent=1 // pred_check_branch
      %220 = sbr.rel (0) target = $region97
    $region96: #{tpu_custom_call.1} parent=1 // pred_region
      %221 = dma.done [#allocation15], 16
    $region97: #{tpu_custom_call.1} parent=1 // pred_fallthru
      _
    // Predicated region
    $region98: #{tpu_custom_call.1} parent=1 // pred_check
      _
    $region99: #{tpu_custom_call.1} parent=1 // pred_check_branch
      %223 = sbr.rel (0) target = $region101
    $region100: #{tpu_custom_call.1} parent=1 // pred_region
      %224 = dma.done [#allocation18], 1024
    $region101: #{tpu_custom_call.1} parent=1 // pred_fallthru
      _
    // Predicated region
    $region102: #{tpu_custom_call.1} parent=1 // pred_check
      _
    $region103: #{tpu_custom_call.1} parent=1 // pred_check_branch
      %226 = sbr.rel (0) target = $region105
    $region104: #{tpu_custom_call.1} parent=1 // pred_region
      %227 = dma.done [#allocation18], 16
    $region105: #{tpu_custom_call.1} parent=1 // pred_fallthru
      _
    // Predicated region
    $region106: #{tpu_custom_call.1} parent=1 // pred_check
      _
    $region107: #{tpu_custom_call.1} parent=1 // pred_check_branch
      %229 = sbr.rel (0) target = $region109
    $region108: #{tpu_custom_call.1} parent=1 // pred_region
      %230 = dma.done [#allocation21], 1024
    $region109: #{tpu_custom_call.1} parent=1 // pred_fallthru
      _
    // Predicated region
    $region110: #{tpu_custom_call.1} parent=1 // pred_check
      _
    $region111: #{tpu_custom_call.1} parent=1 // pred_check_branch
      %232 = sbr.rel (0) target = $region113
    $region112: #{tpu_custom_call.1} parent=1 // pred_region
      %233 = dma.done [#allocation21], 16
    $region113: #{tpu_custom_call.1} parent=1 // pred_fallthru
      _
    // Predicated region
    $region114: #{tpu_custom_call.1} parent=1 // pred_check
      _
    $region115: #{tpu_custom_call.1} parent=1 // pred_check_branch
      %235 = sbr.rel (0) target = $region117
    $region116: #{tpu_custom_call.1} parent=1 // pred_region
      %236 = dma.done [#allocation24], 1024
    $region117: #{tpu_custom_call.1} parent=1 // pred_fallthru
      _
    // Predicated region
    $region118: #{tpu_custom_call.1} parent=1 // pred_check
      _
    $region119: #{tpu_custom_call.1} parent=1 // pred_check_branch
      %238 = sbr.rel (0) target = $region121
    $region120: #{tpu_custom_call.1} parent=1 // pred_region
      %239 = dma.done [#allocation24], 16
    $region121: #{tpu_custom_call.1} parent=1 // pred_fallthru
      _
    %v241 = vld [vmem:[#allocation2] sm:$0xff]
    %v242 = vld [vmem:[#allocation2 + $0x8] sm:$0xff]
    %v243 = vpack.c.bf16 %v242, %v241
    %v244 = vld [vmem:[#allocation5] sm:$0xf]
    %v245 = vld [vmem:[#allocation5 + $0x4] sm:$0xf]
    %v246 = vld [vmem:[#allocation5 + $0x8] sm:$0xf]
    %v247 = vld [vmem:[#allocation5 + $0xc] sm:$0xf]
    %v248 = vld [vmem:[#allocation7] sm:$0x1]
    %v250 = vlaneseq
    %v251 = vshrl.u32 %v250, 7
    %v252 = vsub.s32 0, %v251
    %v253 = vrot.slane %v248, %v252
    %v259 = vunpack.c.l.b16 %v244
    %v260 = vunpack.c.l.b16 %v245
    %v261 = vunpack.c.l.b16 %v246
    %v262 = vunpack.c.l.b16 %v247
    %v263 = vpack.c.b16 %v260, %v259
    %v264 = vpack.c.b16 %v262, %v261
    %vm267 = vcmask 261120
    %v269 = vsel %vm267, %v243, 0
    %271 = vmatprep.subr.bf16.mxu0 0
    %272 = vmatpush1.bf16.msra.mxu0 %v263
    %273 = vmatprep.subr.bf16.mxu0 0
    %274 = vmatpush1.bf16.msra.mxu0 %v264
    %275 = vmatprep.subr.bf16.mxu0 0
    %276 = vmatpush1.bf16.msra.mxu0 0
    %277 = vmatprep.subr.bf16.mxu0 0
    %278 = vmatpush1.bf16.msra.mxu0 0
    %279 = vmatprep.subr.bf16.mxu0 0
    %280 = vmatpush1.bf16.msra.mxu0 0
    %281 = vmatprep.subr.bf16.mxu0 0
    %282 = vmatpush1.bf16.msra.mxu0 0
    %283 = vmatprep.subr.bf16.mxu0 0
    %284 = vmatpush1.bf16.msra.mxu0 0
    %285 = vmatprep.subr.bf16.mxu0 0
    %286 = vmatpush1.bf16.msra.mxu0 0
    %287 = vmatprep.subr.bf16.mxu0 0
    %288 = vmatpush1.bf16.msra.mxu0 0
    %289 = vmatprep.subr.bf16.mxu0 0
    %290 = vmatpush1.bf16.msra.mxu0 0
    %291 = vmatprep.subr.bf16.mxu0 0
    %292 = vmatpush1.bf16.msra.mxu0 0
    %293 = vmatprep.subr.bf16.mxu0 0
    %294 = vmatpush1.bf16.msra.mxu0 0
    %295 = vmatprep.subr.bf16.mxu0 0
    %296 = vmatpush1.bf16.msra.mxu0 0
    %297 = vmatprep.subr.bf16.mxu0 0
    %298 = vmatpush1.bf16.msra.mxu0 0
    %299 = vmatprep.subr.bf16.mxu0 0
    %300 = vmatpush1.bf16.msra.mxu0 0
    %301 = vmatprep.subr.bf16.mxu0 0
    %302 = vmatpush1.bf16.msra.mxu0 0
    %303 = vmatprep.mubr.bf16.mxu0 0
    %304 = vmatmul.mubr.bf16.gmra.mrb[0].mxu0 %v269
    %v305 = vpop.f32.mrb[0].mxu0
    %v306 = vadd.f32 %v253, %v305
    %v307 = vpop.f32.mrb[0].mxu0
    %v308 = vpop.f32.mrb[0].mxu0
    %v309 = vadd.f32 %v253, %v308
    %v310 = vpop.f32.mrb[0].mxu0
    %311 = vdwg.mxu0
    %vm312 = vcmp.gt.f32.partialorder %v306, 0.0
    %vm313 = vcmp.gt.f32.partialorder %v309, 0.0
    %v314 = vmul.f32 %v306, 1.442695
    %v315 = vpow.pop %v314
    %v316 = vmul.f32 %v309, 1.442695
    %v317 = vpow.pop %v316
    %v318 = vsub.f32 %v315, 1.0
    %v319 = vsub.f32 %v317, 1.0
    %v320 = vsel %vm312, %v306, %v318
    %v321 = vsel %vm313, %v309, %v319
    %v322 = vpack.c.bf16 %v321, %v320
    %v323 = vld [vmem:[#allocation8] sm:$0xf]
    %v324 = vld [vmem:[#allocation8 + $0x4] sm:$0xf]
    %v325 = vld [vmem:[#allocation8 + $0x8] sm:$0xf]
    %v326 = vld [vmem:[#allocation8 + $0xc] sm:$0xf]
    %v327 = vld [vmem:[#allocation8 + $0x10] sm:$0xf]
    %v328 = vld [vmem:[#allocation8 + $0x14] sm:$0xf]
    %v329 = vld [vmem:[#allocation8 + $0x18] sm:$0xf]
    %v330 = vld [vmem:[#allocation8 + $0x1c] sm:$0xf]
    %v331 = vld [vmem:[#allocation8 + $0x20] sm:$0xf]
    %v332 = vld [vmem:[#allocation8 + $0x24] sm:$0xf]
    %v333 = vld [vmem:[#allocation8 + $0x28] sm:$0xf]
    %v334 = vld [vmem:[#allocation8 + $0x2c] sm:$0xf]
    %v335 = vld [vmem:[#allocation8 + $0x30] sm:$0xf]
    %v336 = vld [vmem:[#allocation8 + $0x34] sm:$0xf]
    %v337 = vld [vmem:[#allocation8 + $0x38] sm:$0xf]
    %v338 = vld [vmem:[#allocation8 + $0x3c] sm:$0xf]
    %v339 = vld [vmem:[#allocation10] sm:$0x1]
    %v341 = vlaneseq
    %v342 = vshrl.u32 %v341, 7
    %v343 = vsub.s32 0, %v342
    %v344 = vrot.slane %v339, %v343
    %v362 = vunpack.c.l.b16 %v323
    %v363 = vunpack.c.l.b16 %v324
    %v364 = vunpack.c.l.b16 %v325
    %v365 = vunpack.c.l.b16 %v326
    %v366 = vunpack.c.l.b16 %v327
    %v367 = vunpack.c.l.b16 %v328
    %v368 = vunpack.c.l.b16 %v329
    %v369 = vunpack.c.l.b16 %v330
    %v370 = vunpack.c.l.b16 %v331
    %v371 = vunpack.c.l.b16 %v332
    %v372 = vunpack.c.l.b16 %v333
    %v373 = vunpack.c.l.b16 %v334
    %v374 = vunpack.c.l.b16 %v335
    %v375 = vunpack.c.l.b16 %v336
    %v376 = vunpack.c.l.b16 %v337
    %v377 = vunpack.c.l.b16 %v338
    %v378 = vpack.c.b16 %v363, %v362
    %v379 = vpack.c.b16 %v365, %v364
    %v380 = vpack.c.b16 %v367, %v366
    %v381 = vpack.c.b16 %v369, %v368
    %v382 = vpack.c.b16 %v371, %v370
    %v383 = vpack.c.b16 %v373, %v372
    %v384 = vpack.c.b16 %v375, %v374
    %v385 = vpack.c.b16 %v377, %v376
    %394 = vmatprep.subr.bf16.mxu0 0
    %395 = vmatpush1.bf16.msra.mxu0 %v378
    %396 = vmatprep.subr.bf16.mxu0 0
    %397 = vmatpush1.bf16.msra.mxu0 %v379
    %398 = vmatprep.subr.bf16.mxu0 0
    %399 = vmatpush1.bf16.msra.mxu0 %v380
    %400 = vmatprep.subr.bf16.mxu0 0
    %401 = vmatpush1.bf16.msra.mxu0 %v381
    %402 = vmatprep.subr.bf16.mxu0 0
    %403 = vmatpush1.bf16.msra.mxu0 %v382
    %404 = vmatprep.subr.bf16.mxu0 0
    %405 = vmatpush1.bf16.msra.mxu0 %v383
    %406 = vmatprep.subr.bf16.mxu0 0
    %407 = vmatpush1.bf16.msra.mxu0 %v384
    %408 = vmatprep.subr.bf16.mxu0 0
    %409 = vmatpush1.bf16.msra.mxu0 %v385
    %410 = vmatprep.subr.bf16.mxu0 0
    %411 = vmatpush1.bf16.msra.mxu0 0
    %412 = vmatprep.subr.bf16.mxu0 0
    %413 = vmatpush1.bf16.msra.mxu0 0
    %414 = vmatprep.subr.bf16.mxu0 0
    %415 = vmatpush1.bf16.msra.mxu0 0
    %416 = vmatprep.subr.bf16.mxu0 0
    %417 = vmatpush1.bf16.msra.mxu0 0
    %418 = vmatprep.subr.bf16.mxu0 0
    %419 = vmatpush1.bf16.msra.mxu0 0
    %420 = vmatprep.subr.bf16.mxu0 0
    %421 = vmatpush1.bf16.msra.mxu0 0
    %422 = vmatprep.subr.bf16.mxu0 0
    %423 = vmatpush1.bf16.msra.mxu0 0
    %424 = vmatprep.subr.bf16.mxu0 0
    %425 = vmatpush1.bf16.msra.mxu0 0
    %426 = vmatprep.mubr.bf16.mxu0 0
    %427 = vmatmul.mubr.bf16.gmra.mrb[0].mxu0 %v322
    %v428 = vpop.f32.mrb[0].mxu0
    %v429 = vadd.f32 %v344, %v428
    %v430 = vpop.f32.mrb[0].mxu0
    %v431 = vpop.f32.mrb[0].mxu0
    %v432 = vadd.f32 %v344, %v431
    %v433 = vpop.f32.mrb[0].mxu0
    %434 = vdwg.mxu0
    %vm435 = vcmp.gt.f32.partialorder %v429, 0.0
    %vm436 = vcmp.gt.f32.partialorder %v432, 0.0
    %v437 = vmul.f32 %v429, 1.442695
    %v438 = vpow.pop %v437
    %v439 = vmul.f32 %v432, 1.442695
    %v440 = vpow.pop %v439
    %v441 = vsub.f32 %v438, 1.0
    %v442 = vsub.f32 %v440, 1.0
    %v443 = vsel %vm435, %v429, %v441
    %v444 = vsel %vm436, %v432, %v442
    %v445 = vpack.c.bf16 %v444, %v443
    %v446 = vld [vmem:[#allocation11] sm:$0xf]
    %v447 = vld [vmem:[#allocation11 + $0x4] sm:$0xf]
    %v448 = vld [vmem:[#allocation11 + $0x8] sm:$0xf]
    %v449 = vld [vmem:[#allocation11 + $0xc] sm:$0xf]
    %v450 = vld [vmem:[#allocation11 + $0x10] sm:$0xf]
    %v451 = vld [vmem:[#allocation11 + $0x14] sm:$0xf]
    %v452 = vld [vmem:[#allocation11 + $0x18] sm:$0xf]
    %v453 = vld [vmem:[#allocation11 + $0x1c] sm:$0xf]
    %v454 = vld [vmem:[#allocation11 + $0x20] sm:$0xf]
    %v455 = vld [vmem:[#allocation11 + $0x24] sm:$0xf]
    %v456 = vld [vmem:[#allocation11 + $0x28] sm:$0xf]
    %v457 = vld [vmem:[#allocation11 + $0x2c] sm:$0xf]
    %v458 = vld [vmem:[#allocation11 + $0x30] sm:$0xf]
    %v459 = vld [vmem:[#allocation11 + $0x34] sm:$0xf]
    %v460 = vld [vmem:[#allocation11 + $0x38] sm:$0xf]
    %v461 = vld [vmem:[#allocation11 + $0x3c] sm:$0xf]
    %v462 = vld [vmem:[#allocation13] sm:$0x1]
    %v464 = vlaneseq
    %v465 = vshrl.u32 %v464, 7
    %v466 = vsub.s32 0, %v465
    %v467 = vrot.slane %v462, %v466
    %v485 = vunpack.c.l.b16 %v446
    %v486 = vunpack.c.l.b16 %v447
    %v487 = vunpack.c.l.b16 %v448
    %v488 = vunpack.c.l.b16 %v449
    %v489 = vunpack.c.l.b16 %v450
    %v490 = vunpack.c.l.b16 %v451
    %v491 = vunpack.c.l.b16 %v452
    %v492 = vunpack.c.l.b16 %v453
    %v493 = vunpack.c.l.b16 %v454
    %v494 = vunpack.c.l.b16 %v455
    %v495 = vunpack.c.l.b16 %v456
    %v496 = vunpack.c.l.b16 %v457
    %v497 = vunpack.c.l.b16 %v458
    %v498 = vunpack.c.l.b16 %v459
    %v499 = vunpack.c.l.b16 %v460
    %v500 = vunpack.c.l.b16 %v461
    %v501 = vpack.c.b16 %v486, %v485
    %v502 = vpack.c.b16 %v488, %v487
    %v503 = vpack.c.b16 %v490, %v489
    %v504 = vpack.c.b16 %v492, %v491
    %v505 = vpack.c.b16 %v494, %v493
    %v506 = vpack.c.b16 %v496, %v495
    %v507 = vpack.c.b16 %v498, %v497
    %v508 = vpack.c.b16 %v500, %v499
    %517 = vmatprep.subr.bf16.mxu0 0
    %518 = vmatpush1.bf16.msra.mxu0 %v501
    %519 = vmatprep.subr.bf16.mxu0 0
    %520 = vmatpush1.bf16.msra.mxu0 %v502
    %521 = vmatprep.subr.bf16.mxu0 0
    %522 = vmatpush1.bf16.msra.mxu0 %v503
    %523 = vmatprep.subr.bf16.mxu0 0
    %524 = vmatpush1.bf16.msra.mxu0 %v504
    %525 = vmatprep.subr.bf16.mxu0 0
    %526 = vmatpush1.bf16.msra.mxu0 %v505
    %527 = vmatprep.subr.bf16.mxu0 0
    %528 = vmatpush1.bf16.msra.mxu0 %v506
    %529 = vmatprep.subr.bf16.mxu0 0
    %530 = vmatpush1.bf16.msra.mxu0 %v507
    %531 = vmatprep.subr.bf16.mxu0 0
    %532 = vmatpush1.bf16.msra.mxu0 %v508
    %533 = vmatprep.subr.bf16.mxu0 0
    %534 = vmatpush1.bf16.msra.mxu0 0
    %535 = vmatprep.subr.bf16.mxu0 0
    %536 = vmatpush1.bf16.msra.mxu0 0
    %537 = vmatprep.subr.bf16.mxu0 0
    %538 = vmatpush1.bf16.msra.mxu0 0
    %539 = vmatprep.subr.bf16.mxu0 0
    %540 = vmatpush1.bf16.msra.mxu0 0
    %541 = vmatprep.subr.bf16.mxu0 0
    %542 = vmatpush1.bf16.msra.mxu0 0
    %543 = vmatprep.subr.bf16.mxu0 0
    %544 = vmatpush1.bf16.msra.mxu0 0
    %545 = vmatprep.subr.bf16.mxu0 0
    %546 = vmatpush1.bf16.msra.mxu0 0
    %547 = vmatprep.subr.bf16.mxu0 0
    %548 = vmatpush1.bf16.msra.mxu0 0
    %549 = vmatprep.mubr.bf16.mxu0 0
    %550 = vmatmul.mubr.bf16.gmra.mrb[0].mxu0 %v445
    %v551 = vpop.f32.mrb[0].mxu0
    %v552 = vadd.f32 %v467, %v551
    %v553 = vpop.f32.mrb[0].mxu0
    %v554 = vpop.f32.mrb[0].mxu0
    %v555 = vadd.f32 %v467, %v554
    %v556 = vpop.f32.mrb[0].mxu0
    %557 = vdwg.mxu0
    %v558 = vadd.f32 %v320, %v552
    %v559 = vadd.f32 %v321, %v555
    %vm560 = vcmp.gt.f32.partialorder %v558, 0.0
    %vm561 = vcmp.gt.f32.partialorder %v559, 0.0
    %v562 = vmul.f32 %v558, 1.442695
    %v563 = vpow.pop %v562
    %v564 = vmul.f32 %v559, 1.442695
    %v565 = vpow.pop %v564
    %v566 = vsub.f32 %v563, 1.0
    %v567 = vsub.f32 %v565, 1.0
    %v568 = vsel %vm560, %v558, %v566
    %v569 = vsel %vm561, %v559, %v567
    %v570 = vpack.c.bf16 %v569, %v568
    %v571 = vld [vmem:[#allocation14] sm:$0xf]
    %v572 = vld [vmem:[#allocation14 + $0x4] sm:$0xf]
    %v573 = vld [vmem:[#allocation14 + $0x8] sm:$0xf]
    %v574 = vld [vmem:[#allocation14 + $0xc] sm:$0xf]
    %v575 = vld [vmem:[#allocation14 + $0x10] sm:$0xf]
    %v576 = vld [vmem:[#allocation14 + $0x14] sm:$0xf]
    %v577 = vld [vmem:[#allocation14 + $0x18] sm:$0xf]
    %v578 = vld [vmem:[#allocation14 + $0x1c] sm:$0xf]
    %v579 = vld [vmem:[#allocation14 + $0x20] sm:$0xf]
    %v580 = vld [vmem:[#allocation14 + $0x24] sm:$0xf]
    %v581 = vld [vmem:[#allocation14 + $0x28] sm:$0xf]
    %v582 = vld [vmem:[#allocation14 + $0x2c] sm:$0xf]
    %v583 = vld [vmem:[#allocation14 + $0x30] sm:$0xf]
    %v584 = vld [vmem:[#allocation14 + $0x34] sm:$0xf]
    %v585 = vld [vmem:[#allocation14 + $0x38] sm:$0xf]
    %v586 = vld [vmem:[#allocation14 + $0x3c] sm:$0xf]
    %v587 = vld [vmem:[#allocation16] sm:$0x1]
    %v589 = vlaneseq
    %v590 = vshrl.u32 %v589, 7
    %v591 = vsub.s32 0, %v590
    %v592 = vrot.slane %v587, %v591
    %v610 = vunpack.c.l.b16 %v571
    %v611 = vunpack.c.l.b16 %v572
    %v612 = vunpack.c.l.b16 %v573
    %v613 = vunpack.c.l.b16 %v574
    %v614 = vunpack.c.l.b16 %v575
    %v615 = vunpack.c.l.b16 %v576
    %v616 = vunpack.c.l.b16 %v577
    %v617 = vunpack.c.l.b16 %v578
    %v618 = vunpack.c.l.b16 %v579
    %v619 = vunpack.c.l.b16 %v580
    %v620 = vunpack.c.l.b16 %v581
    %v621 = vunpack.c.l.b16 %v582
    %v622 = vunpack.c.l.b16 %v583
    %v623 = vunpack.c.l.b16 %v584
    %v624 = vunpack.c.l.b16 %v585
    %v625 = vunpack.c.l.b16 %v586
    %v626 = vpack.c.b16 %v611, %v610
    %v627 = vpack.c.b16 %v613, %v612
    %v628 = vpack.c.b16 %v615, %v614
    %v629 = vpack.c.b16 %v617, %v616
    %v630 = vpack.c.b16 %v619, %v618
    %v631 = vpack.c.b16 %v621, %v620
    %v632 = vpack.c.b16 %v623, %v622
    %v633 = vpack.c.b16 %v625, %v624
    %642 = vmatprep.subr.bf16.mxu0 0
    %643 = vmatpush1.bf16.msra.mxu0 %v626
    %644 = vmatprep.subr.bf16.mxu0 0
    %645 = vmatpush1.bf16.msra.mxu0 %v627
    %646 = vmatprep.subr.bf16.mxu0 0
    %647 = vmatpush1.bf16.msra.mxu0 %v628
    %648 = vmatprep.subr.bf16.mxu0 0
    %649 = vmatpush1.bf16.msra.mxu0 %v629
    %650 = vmatprep.subr.bf16.mxu0 0
    %651 = vmatpush1.bf16.msra.mxu0 %v630
    %652 = vmatprep.subr.bf16.mxu0 0
    %653 = vmatpush1.bf16.msra.mxu0 %v631
    %654 = vmatprep.subr.bf16.mxu0 0
    %655 = vmatpush1.bf16.msra.mxu0 %v632
    %656 = vmatprep.subr.bf16.mxu0 0
    %657 = vmatpush1.bf16.msra.mxu0 %v633
    %658 = vmatprep.subr.bf16.mxu0 0
    %659 = vmatpush1.bf16.msra.mxu0 0
    %660 = vmatprep.subr.bf16.mxu0 0
    %661 = vmatpush1.bf16.msra.mxu0 0
    %662 = vmatprep.subr.bf16.mxu0 0
    %663 = vmatpush1.bf16.msra.mxu0 0
    %664 = vmatprep.subr.bf16.mxu0 0
    %665 = vmatpush1.bf16.msra.mxu0 0
    %666 = vmatprep.subr.bf16.mxu0 0
    %667 = vmatpush1.bf16.msra.mxu0 0
    %668 = vmatprep.subr.bf16.mxu0 0
    %669 = vmatpush1.bf16.msra.mxu0 0
    %670 = vmatprep.subr.bf16.mxu0 0
    %671 = vmatpush1.bf16.msra.mxu0 0
    %672 = vmatprep.subr.bf16.mxu0 0
    %673 = vmatpush1.bf16.msra.mxu0 0
    %674 = vmatprep.mubr.bf16.mxu0 0
    %675 = vmatmul.mubr.bf16.gmra.mrb[0].mxu0 %v570
    %v676 = vpop.f32.mrb[0].mxu0
    %v677 = vadd.f32 %v592, %v676
    %v678 = vpop.f32.mrb[0].mxu0
    %v679 = vpop.f32.mrb[0].mxu0
    %v680 = vadd.f32 %v592, %v679
    %v681 = vpop.f32.mrb[0].mxu0
    %682 = vdwg.mxu0
    %vm683 = vcmp.gt.f32.partialorder %v677, 0.0
    %vm684 = vcmp.gt.f32.partialorder %v680, 0.0
    %v685 = vmul.f32 %v677, 1.442695
    %v686 = vpow.pop %v685
    %v687 = vmul.f32 %v680, 1.442695
    %v688 = vpow.pop %v687
    %v689 = vsub.f32 %v686, 1.0
    %v690 = vsub.f32 %v688, 1.0
    %v691 = vsel %vm683, %v677, %v689
    %v692 = vsel %vm684, %v680, %v690
    %v693 = vpack.c.bf16 %v692, %v691
    %v694 = vld [vmem:[#allocation17] sm:$0xf]
    %v695 = vld [vmem:[#allocation17 + $0x4] sm:$0xf]
    %v696 = vld [vmem:[#allocation17 + $0x8] sm:$0xf]
    %v697 = vld [vmem:[#allocation17 + $0xc] sm:$0xf]
    %v698 = vld [vmem:[#allocation17 + $0x10] sm:$0xf]
    %v699 = vld [vmem:[#allocation17 + $0x14] sm:$0xf]
    %v700 = vld [vmem:[#allocation17 + $0x18] sm:$0xf]
    %v701 = vld [vmem:[#allocation17 + $0x1c] sm:$0xf]
    %v702 = vld [vmem:[#allocation17 + $0x20] sm:$0xf]
    %v703 = vld [vmem:[#allocation17 + $0x24] sm:$0xf]
    %v704 = vld [vmem:[#allocation17 + $0x28] sm:$0xf]
    %v705 = vld [vmem:[#allocation17 + $0x2c] sm:$0xf]
    %v706 = vld [vmem:[#allocation17 + $0x30] sm:$0xf]
    %v707 = vld [vmem:[#allocation17 + $0x34] sm:$0xf]
    %v708 = vld [vmem:[#allocation17 + $0x38] sm:$0xf]
    %v709 = vld [vmem:[#allocation17 + $0x3c] sm:$0xf]
    %v710 = vld [vmem:[#allocation19] sm:$0x1]
    %v712 = vlaneseq
    %v713 = vshrl.u32 %v712, 7
    %v714 = vsub.s32 0, %v713
    %v715 = vrot.slane %v710, %v714
    %v733 = vunpack.c.l.b16 %v694
    %v734 = vunpack.c.l.b16 %v695
    %v735 = vunpack.c.l.b16 %v696
    %v736 = vunpack.c.l.b16 %v697
    %v737 = vunpack.c.l.b16 %v698
    %v738 = vunpack.c.l.b16 %v699
    %v739 = vunpack.c.l.b16 %v700
    %v740 = vunpack.c.l.b16 %v701
    %v741 = vunpack.c.l.b16 %v702
    %v742 = vunpack.c.l.b16 %v703
    %v743 = vunpack.c.l.b16 %v704
    %v744 = vunpack.c.l.b16 %v705
    %v745 = vunpack.c.l.b16 %v706
    %v746 = vunpack.c.l.b16 %v707
    %v747 = vunpack.c.l.b16 %v708
    %v748 = vunpack.c.l.b16 %v709
    %v749 = vpack.c.b16 %v734, %v733
    %v750 = vpack.c.b16 %v736, %v735
    %v751 = vpack.c.b16 %v738, %v737
    %v752 = vpack.c.b16 %v740, %v739
    %v753 = vpack.c.b16 %v742, %v741
    %v754 = vpack.c.b16 %v744, %v743
    %v755 = vpack.c.b16 %v746, %v745
    %v756 = vpack.c.b16 %v748, %v747
    %765 = vmatprep.subr.bf16.mxu0 0
    %766 = vmatpush1.bf16.msra.mxu0 %v749
    %767 = vmatprep.subr.bf16.mxu0 0
    %768 = vmatpush1.bf16.msra.mxu0 %v750
    %769 = vmatprep.subr.bf16.mxu0 0
    %770 = vmatpush1.bf16.msra.mxu0 %v751
    %771 = vmatprep.subr.bf16.mxu0 0
    %772 = vmatpush1.bf16.msra.mxu0 %v752
    %773 = vmatprep.subr.bf16.mxu0 0
    %774 = vmatpush1.bf16.msra.mxu0 %v753
    %775 = vmatprep.subr.bf16.mxu0 0
    %776 = vmatpush1.bf16.msra.mxu0 %v754
    %777 = vmatprep.subr.bf16.mxu0 0
    %778 = vmatpush1.bf16.msra.mxu0 %v755
    %779 = vmatprep.subr.bf16.mxu0 0
    %780 = vmatpush1.bf16.msra.mxu0 %v756
    %781 = vmatprep.subr.bf16.mxu0 0
    %782 = vmatpush1.bf16.msra.mxu0 0
    %783 = vmatprep.subr.bf16.mxu0 0
    %784 = vmatpush1.bf16.msra.mxu0 0
    %785 = vmatprep.subr.bf16.mxu0 0
    %786 = vmatpush1.bf16.msra.mxu0 0
    %787 = vmatprep.subr.bf16.mxu0 0
    %788 = vmatpush1.bf16.msra.mxu0 0
    %789 = vmatprep.subr.bf16.mxu0 0
    %790 = vmatpush1.bf16.msra.mxu0 0
    %791 = vmatprep.subr.bf16.mxu0 0
    %792 = vmatpush1.bf16.msra.mxu0 0
    %793 = vmatprep.subr.bf16.mxu0 0
    %794 = vmatpush1.bf16.msra.mxu0 0
    %795 = vmatprep.subr.bf16.mxu0 0
    %796 = vmatpush1.bf16.msra.mxu0 0
    %797 = vmatprep.mubr.bf16.mxu0 0
    %798 = vmatmul.mubr.bf16.gmra.mrb[0].mxu0 %v693
    %v799 = vpop.f32.mrb[0].mxu0
    %v800 = vadd.f32 %v715, %v799
    %v801 = vpop.f32.mrb[0].mxu0
    %v802 = vpop.f32.mrb[0].mxu0
    %v803 = vadd.f32 %v715, %v802
    %v804 = vpop.f32.mrb[0].mxu0
    %805 = vdwg.mxu0
    %v806 = vadd.f32 %v568, %v800
    %v807 = vadd.f32 %v569, %v803
    %vm808 = vcmp.gt.f32.partialorder %v806, 0.0
    %vm809 = vcmp.gt.f32.partialorder %v807, 0.0
    %v810 = vmul.f32 %v806, 1.442695
    %v811 = vpow.pop %v810
    %v812 = vmul.f32 %v807, 1.442695
    %v813 = vpow.pop %v812
    %v814 = vsub.f32 %v811, 1.0
    %v815 = vsub.f32 %v813, 1.0
    %v816 = vsel %vm808, %v806, %v814
    %v817 = vsel %vm809, %v807, %v815
    %v818 = vpack.c.bf16 %v817, %v816
    %v819 = vld [vmem:[#allocation20] sm:$0xf]
    %v820 = vld [vmem:[#allocation20 + $0x4] sm:$0xf]
    %v821 = vld [vmem:[#allocation20 + $0x8] sm:$0xf]
    %v822 = vld [vmem:[#allocation20 + $0xc] sm:$0xf]
    %v823 = vld [vmem:[#allocation20 + $0x10] sm:$0xf]
    %v824 = vld [vmem:[#allocation20 + $0x14] sm:$0xf]
    %v825 = vld [vmem:[#allocation20 + $0x18] sm:$0xf]
    %v826 = vld [vmem:[#allocation20 + $0x1c] sm:$0xf]
    %v827 = vld [vmem:[#allocation20 + $0x20] sm:$0xf]
    %v828 = vld [vmem:[#allocation20 + $0x24] sm:$0xf]
    %v829 = vld [vmem:[#allocation20 + $0x28] sm:$0xf]
    %v830 = vld [vmem:[#allocation20 + $0x2c] sm:$0xf]
    %v831 = vld [vmem:[#allocation20 + $0x30] sm:$0xf]
    %v832 = vld [vmem:[#allocation20 + $0x34] sm:$0xf]
    %v833 = vld [vmem:[#allocation20 + $0x38] sm:$0xf]
    %v834 = vld [vmem:[#allocation20 + $0x3c] sm:$0xf]
    %v835 = vld [vmem:[#allocation22] sm:$0x1]
    %v837 = vlaneseq
    %v838 = vshrl.u32 %v837, 7
    %v839 = vsub.s32 0, %v838
    %v840 = vrot.slane %v835, %v839
    %v858 = vunpack.c.l.b16 %v819
    %v859 = vunpack.c.l.b16 %v820
    %v860 = vunpack.c.l.b16 %v821
    %v861 = vunpack.c.l.b16 %v822
    %v862 = vunpack.c.l.b16 %v823
    %v863 = vunpack.c.l.b16 %v824
    %v864 = vunpack.c.l.b16 %v825
    %v865 = vunpack.c.l.b16 %v826
    %v866 = vunpack.c.l.b16 %v827
    %v867 = vunpack.c.l.b16 %v828
    %v868 = vunpack.c.l.b16 %v829
    %v869 = vunpack.c.l.b16 %v830
    %v870 = vunpack.c.l.b16 %v831
    %v871 = vunpack.c.l.b16 %v832
    %v872 = vunpack.c.l.b16 %v833
    %v873 = vunpack.c.l.b16 %v834
    %v874 = vpack.c.b16 %v859, %v858
    %v875 = vpack.c.b16 %v861, %v860
    %v876 = vpack.c.b16 %v863, %v862
    %v877 = vpack.c.b16 %v865, %v864
    %v878 = vpack.c.b16 %v867, %v866
    %v879 = vpack.c.b16 %v869, %v868
    %v880 = vpack.c.b16 %v871, %v870
    %v881 = vpack.c.b16 %v873, %v872
    %890 = vmatprep.subr.bf16.mxu0 0
    %891 = vmatpush1.bf16.msra.mxu0 %v874
    %892 = vmatprep.subr.bf16.mxu0 0
    %893 = vmatpush1.bf16.msra.mxu0 %v875
    %894 = vmatprep.subr.bf16.mxu0 0
    %895 = vmatpush1.bf16.msra.mxu0 %v876
    %896 = vmatprep.subr.bf16.mxu0 0
    %897 = vmatpush1.bf16.msra.mxu0 %v877
    %898 = vmatprep.subr.bf16.mxu0 0
    %899 = vmatpush1.bf16.msra.mxu0 %v878
    %900 = vmatprep.subr.bf16.mxu0 0
    %901 = vmatpush1.bf16.msra.mxu0 %v879
    %902 = vmatprep.subr.bf16.mxu0 0
    %903 = vmatpush1.bf16.msra.mxu0 %v880
    %904 = vmatprep.subr.bf16.mxu0 0
    %905 = vmatpush1.bf16.msra.mxu0 %v881
    %906 = vmatprep.subr.bf16.mxu0 0
    %907 = vmatpush1.bf16.msra.mxu0 0
    %908 = vmatprep.subr.bf16.mxu0 0
    %909 = vmatpush1.bf16.msra.mxu0 0
    %910 = vmatprep.subr.bf16.mxu0 0
    %911 = vmatpush1.bf16.msra.mxu0 0
    %912 = vmatprep.subr.bf16.mxu0 0
    %913 = vmatpush1.bf16.msra.mxu0 0
    %914 = vmatprep.subr.bf16.mxu0 0
    %915 = vmatpush1.bf16.msra.mxu0 0
    %916 = vmatprep.subr.bf16.mxu0 0
    %917 = vmatpush1.bf16.msra.mxu0 0
    %918 = vmatprep.subr.bf16.mxu0 0
    %919 = vmatpush1.bf16.msra.mxu0 0
    %920 = vmatprep.subr.bf16.mxu0 0
    %921 = vmatpush1.bf16.msra.mxu0 0
    %922 = vmatprep.mubr.bf16.mxu0 0
    %923 = vmatmul.mubr.bf16.gmra.mrb[0].mxu0 %v818
    %v924 = vpop.f32.mrb[0].mxu0
    %v925 = vadd.f32 %v840, %v924
    %v926 = vpop.f32.mrb[0].mxu0
    %v927 = vpop.f32.mrb[0].mxu0
    %v928 = vadd.f32 %v840, %v927
    %v929 = vpop.f32.mrb[0].mxu0
    %930 = vdwg.mxu0
    %vm931 = vcmp.gt.f32.partialorder %v925, 0.0
    %vm932 = vcmp.gt.f32.partialorder %v928, 0.0
    %v933 = vmul.f32 %v925, 1.442695
    %v934 = vpow.pop %v933
    %v935 = vmul.f32 %v928, 1.442695
    %v936 = vpow.pop %v935
    %v937 = vsub.f32 %v934, 1.0
    %v938 = vsub.f32 %v936, 1.0
    %v939 = vsel %vm931, %v925, %v937
    %v940 = vsel %vm932, %v928, %v938
    %v941 = vpack.c.bf16 %v940, %v939
    %v942 = vld [vmem:[#allocation23] sm:$0xf]
    %v943 = vld [vmem:[#allocation23 + $0x4] sm:$0xf]
    %v944 = vld [vmem:[#allocation23 + $0x8] sm:$0xf]
    %v945 = vld [vmem:[#allocation23 + $0xc] sm:$0xf]
    %v946 = vld [vmem:[#allocation23 + $0x10] sm:$0xf]
    %v947 = vld [vmem:[#allocation23 + $0x14] sm:$0xf]
    %v948 = vld [vmem:[#allocation23 + $0x18] sm:$0xf]
    %v949 = vld [vmem:[#allocation23 + $0x1c] sm:$0xf]
    %v950 = vld [vmem:[#allocation23 + $0x20] sm:$0xf]
    %v951 = vld [vmem:[#allocation23 + $0x24] sm:$0xf]
    %v952 = vld [vmem:[#allocation23 + $0x28] sm:$0xf]
    %v953 = vld [vmem:[#allocation23 + $0x2c] sm:$0xf]
    %v954 = vld [vmem:[#allocation23 + $0x30] sm:$0xf]
    %v955 = vld [vmem:[#allocation23 + $0x34] sm:$0xf]
    %v956 = vld [vmem:[#allocation23 + $0x38] sm:$0xf]
    %v957 = vld [vmem:[#allocation23 + $0x3c] sm:$0xf]
    %v958 = vld [vmem:[#allocation25] sm:$0x1]
    %v960 = vlaneseq
    %v961 = vshrl.u32 %v960, 7
    %v962 = vsub.s32 0, %v961
    %v963 = vrot.slane %v958, %v962
    %v981 = vunpack.c.l.b16 %v942
    %v982 = vunpack.c.l.b16 %v943
    %v983 = vunpack.c.l.b16 %v944
    %v984 = vunpack.c.l.b16 %v945
    %v985 = vunpack.c.l.b16 %v946
    %v986 = vunpack.c.l.b16 %v947
    %v987 = vunpack.c.l.b16 %v948
    %v988 = vunpack.c.l.b16 %v949
    %v989 = vunpack.c.l.b16 %v950
    %v990 = vunpack.c.l.b16 %v951
    %v991 = vunpack.c.l.b16 %v952
    %v992 = vunpack.c.l.b16 %v953
    %v993 = vunpack.c.l.b16 %v954
    %v994 = vunpack.c.l.b16 %v955
    %v995 = vunpack.c.l.b16 %v956
    %v996 = vunpack.c.l.b16 %v957
    %v997 = vpack.c.b16 %v982, %v981
    %v998 = vpack.c.b16 %v984, %v983
    %v999 = vpack.c.b16 %v986, %v985
    %v1000 = vpack.c.b16 %v988, %v987
    %v1001 = vpack.c.b16 %v990, %v989
    %v1002 = vpack.c.b16 %v992, %v991
    %v1003 = vpack.c.b16 %v994, %v993
    %v1004 = vpack.c.b16 %v996, %v995
    %1013 = vmatprep.subr.bf16.mxu0 0
    %1014 = vmatpush1.bf16.msra.mxu0 %v997
    %1015 = vmatprep.subr.bf16.mxu0 0
    %1016 = vmatpush1.bf16.msra.mxu0 %v998
    %1017 = vmatprep.subr.bf16.mxu0 0
    %1018 = vmatpush1.bf16.msra.mxu0 %v999
    %1019 = vmatprep.subr.bf16.mxu0 0
    %1020 = vmatpush1.bf16.msra.mxu0 %v1000
    %1021 = vmatprep.subr.bf16.mxu0 0
    %1022 = vmatpush1.bf16.msra.mxu0 %v1001
    %1023 = vmatprep.subr.bf16.mxu0 0
    %1024 = vmatpush1.bf16.msra.mxu0 %v1002
    %1025 = vmatprep.subr.bf16.mxu0 0
    %1026 = vmatpush1.bf16.msra.mxu0 %v1003
    %1027 = vmatprep.subr.bf16.mxu0 0
    %1028 = vmatpush1.bf16.msra.mxu0 %v1004
    %1029 = vmatprep.subr.bf16.mxu0 0
    %1030 = vmatpush1.bf16.msra.mxu0 0
    %1031 = vmatprep.subr.bf16.mxu0 0
    %1032 = vmatpush1.bf16.msra.mxu0 0
    %1033 = vmatprep.subr.bf16.mxu0 0
    %1034 = vmatpush1.bf16.msra.mxu0 0
    %1035 = vmatprep.subr.bf16.mxu0 0
    %1036 = vmatpush1.bf16.msra.mxu0 0
    %1037 = vmatprep.subr.bf16.mxu0 0
    %1038 = vmatpush1.bf16.msra.mxu0 0
    %1039 = vmatprep.subr.bf16.mxu0 0
    %1040 = vmatpush1.bf16.msra.mxu0 0
    %1041 = vmatprep.subr.bf16.mxu0 0
    %1042 = vmatpush1.bf16.msra.mxu0 0
    %1043 = vmatprep.subr.bf16.mxu0 0
    %1044 = vmatpush1.bf16.msra.mxu0 0
    %1045 = vmatprep.mubr.bf16.mxu0 0
    %1046 = vmatmul.mubr.bf16.gmra.mrb[0].mxu0 %v941
    %v1047 = vpop.f32.mrb[0].mxu0
    %v1048 = vadd.f32 %v963, %v1047
    %v1049 = vpop.f32.mrb[0].mxu0
    %v1050 = vpop.f32.mrb[0].mxu0
    %v1051 = vadd.f32 %v963, %v1050
    %v1052 = vpop.f32.mrb[0].mxu0
    %1053 = vdwg.mxu0
    %v1054 = vadd.f32 %v816, %v1048
    %v1055 = vadd.f32 %v817, %v1051
    %1056 = vst [vmem:[#allocation26] sm:$0xff] %v1054
    %1057 = vst [vmem:[#allocation26 + $0x8] sm:$0xff] %v1055
    // Predicated region
    $region122: #{tpu_custom_call.1} parent=1 // pred_check
      _
    $region123: #{tpu_custom_call.1} parent=1 // pred_check_branch
      %1059 = sbr.rel (0) target = $region125
    $region124: #{tpu_custom_call.1} parent=1 // pred_region
      %s1061 = ssub.s32 256, 256
      %1062 = vsyncadd [#allocation4], %s1061
      %s1063 = sshll.u32 [#allocation26], 4
      %s1064 = int_to_ptr.vmem [resolvable:$true] %s1063
      %1069 = dma.vmem_to_hbm [thread:$0]  %s1064, 256, %s15, [#allocation4], 128, 128, 8
    $region125: #{tpu_custom_call.1} parent=1 // pred_fallthru
      _
    // Predicated region
    $region126: #{tpu_custom_call.1} parent=1 // pred_check
      _
    $region127: #{tpu_custom_call.1} parent=1 // pred_check_branch
      %1071 = sbr.rel (0) target = $region129
    $region128: #{tpu_custom_call.1} parent=1 // pred_region
      %1072 = dma.done [#allocation4], 256
    $region129: #{tpu_custom_call.1} parent=1 // pred_fallthru
      _
    %1073 = vsyncpa [#allocation3], 1
    %1074 = vsyncpa [#allocation6], 1
    %1075 = vsyncpa [#allocation9], 1
    %1076 = vsyncpa [#allocation12], 1
    %1077 = vsyncpa [#allocation15], 1
    %1078 = vsyncpa [#allocation18], 1
    %1079 = vsyncpa [#allocation21], 1
    %1080 = vsyncpa [#allocation24], 1
    %1081 = vsyncpa [#allocation4], 1

</llo_original>
